<compile_context>
chip_gen: v7x
topology: tpu7x:2x2x1
jax: 0.10.0
libtpu: 0.0.40
codegen_flags: <defaults>
</compile_context>

<pallas_src>
import functools

import jax
import jax.numpy as jnp
from jax.experimental import pallas as pl
from jax.experimental.pallas import tpu as pltpu

EPS = 1e-5
LANE = 128


def _round_up(n, m):
    return ((n + m - 1) // m) * m


def _pad2d(a, rows, cols):
    return jnp.pad(a, ((0, rows - a.shape[0]), (0, cols - a.shape[1])))


def _pick_tile(batch, cap=512):
    # Split the batch into ceil(B/cap) near-equal tiles, rounded up to a multiple of 16
    # (bf16 sublane packing).  Waste from batch padding is bounded by < one tile.
    # On v7x the cap can be raised to 1024 (bf16 tiles leave plenty of VMEM headroom).
    n_tiles = -(-batch // cap)
    return min(cap, _round_up(-(-batch // n_tiles), 16))


# --------------- Pass 1 & 2: Linear (+bias) + ReLU + per-tile batch stats ---------------
def _linear_relu_stats_kernel(x_ref, w_ref, b_ref, h_ref, sum_ref, sq_ref,
                              *, true_batch, tile_batch, need_mask):
    # bf16 MXU operands (the cast is a no-op when the input tile is already bf16),
    # f32 accumulation; bias / ReLU / stats stay f32.
    h = jnp.dot(x_ref[...].astype(jnp.bfloat16), w_ref[...],
                preferred_element_type=jnp.float32) + b_ref[...]
    h = jnp.maximum(h, 0.0)
    h_ref[...] = h.astype(h_ref.dtype)          # bf16 activation store (halves HBM traffic)

    if need_mask:
        # Zero-padded batch rows: relu(0 @ W + b) = relu(b) != 0 — keep them out of stats.
        rows = (jax.lax.broadcasted_iota(jnp.int32, (tile_batch, 1), 0)
                + pl.program_id(0) * tile_batch)
        h = jnp.where(rows < true_batch, h, 0.0)

    # Per-tile partial stats written to their own (1,1,Hp) block: the batch axis stays
    # "parallel" (megacore-shardable on v7x); the cross-tile reduction + BN fold is a
    # tiny wrapper op.
    sum_ref[...] = jnp.sum(h, axis=0, keepdims=True).reshape(1, 1, -1)
    sq_ref[...] = jnp.sum(h * h, axis=0, keepdims=True).reshape(1, 1, -1)


# ----------------------- Pass 3: output Linear (BN already folded) ----------------------
def _linear_kernel(h_ref, w_ref, b_ref, o_ref):
    o_ref[...] = (jnp.dot(h_ref[...], w_ref[...], preferred_element_type=jnp.float32)
                  + b_ref[...]).astype(o_ref.dtype)


def _bn_fold(psum, psq, gamma, beta, w_f32, b, n):
    """Reduce per-tile stats and fold the training-mode BN affine into (w, b).

    Returns (w_fold_bf16, b_fold_f32) such that  bn(h) @ w + b == h @ w_fold + b_fold.
    All (1, Hp)-sized; the only O(Hp^2) work is the row-scale of w (tiny vs. B*Hp).
    """
    inv_n = 1.0 / float(n)
    mean = jnp.sum(psum, axis=0) * inv_n                                   # (1, Hp)
    var = jnp.maximum(jnp.sum(psq, axis=0) * inv_n - mean * mean, 0.0)     # clamp f32 rounding
    scale = gamma * jax.lax.rsqrt(var + EPS)
    shift = beta - mean * scale
    w_fold = (scale.reshape(-1, 1) * w_f32).astype(jnp.bfloat16)           # row-scaled, bf16
    b_fold = b + shift @ w_f32
    return w_fold, b_fold


@functools.partial(jax.jit, static_argnames=("tile_batch",))
def meta_classifier_forward(x, params, tile_batch=None):
    """x: (B, input_dim) float32. params: output of `prepare_params`. Returns (B, 2) f32."""
    B, D = x.shape
    Hp = params["w1"].shape[1]       # lane-padded hidden dim
    Op = params["w3"].shape[1]       # lane-padded output dim (128)

    TB = tile_batch if tile_batch is not None else _pick_tile(B)
    B_pad = _round_up(B, TB)
    nt = B_pad // TB
    need_mask = B_pad != B
    if need_mask:
        x = jnp.pad(x, ((0, B_pad - B), (0, 0)))   # masked out of stats inside the kernel

    kern = functools.partial(_linear_relu_stats_kernel, true_batch=B,
                             tile_batch=TB, need_mask=need_mask)

    def const_spec(shape):
        # Constant-index blocks (weights / biases): DMA'd once, stay resident.
        return pl.BlockSpec(shape, lambda i, _n=len(shape): (0,) * _n)

    stats_shape = jax.ShapeDtypeStruct((nt, 1, Hp), jnp.float32)
    stats_spec = pl.BlockSpec((1, 1, Hp), lambda i: (i, 0, 0))
    h_spec = pl.BlockSpec((TB, Hp), lambda i: (i, 0))
    cparams = pltpu.CompilerParams(dimension_semantics=("parallel",),
                                   vmem_limit_bytes=32 * 1024 * 1024)

    # ---------------- pass 1: h1 = relu(x @ w1 + b1), per-tile BN1 stats ----------------
    h1, s1, q1 = pl.pallas_call(
        kern,
        out_shape=(jax.ShapeDtypeStruct((B_pad, Hp), jnp.bfloat16),
                   stats_shape, stats_shape),
        grid=(nt,),
        in_specs=[pl.BlockSpec((TB, D), lambda i: (i, 0)),   # full last dim: no x padding
                  const_spec((D, Hp)),
                  const_spec((1, Hp))],
        out_specs=(h_spec, stats_spec, stats_spec),
        compiler_params=cparams,
        cost_estimate=pl.CostEstimate(
            flops=2 * B_pad * D * Hp + 4 * B_pad * Hp, transcendentals=0,
            bytes_accessed=4 * B_pad * D + 2 * (D * Hp + B_pad * Hp) + 12 * nt * Hp),
    )(x, params["w1"], params["b1"])

    # Reduce BN1 stats and fold BN1 into (w2, b2) — tiny wrapper ops.
    w2f, b2f = _bn_fold(s1, q1, params["g1"], params["be1"],
                        params["w2"], params["b2"], B)

    # -------- pass 2: h2 = relu(bn1(h1) @ w2 + b2) via folded weights, BN2 stats --------
    h2, s2, q2 = pl.pallas_call(
        kern,
        out_shape=(jax.ShapeDtypeStruct((B_pad, Hp), jnp.bfloat16),
                   stats_shape, stats_shape),
        grid=(nt,),
        in_specs=[h_spec, const_spec((Hp, Hp)), const_spec((1, Hp))],
        out_specs=(h_spec, stats_spec, stats_spec),
        compiler_params=cparams,
        cost_estimate=pl.CostEstimate(
            flops=2 * B_pad * Hp * Hp + 4 * B_pad * Hp, transcendentals=0,
            bytes_accessed=2 * (2 * B_pad * Hp + Hp * Hp) + 12 * nt * Hp),
    )(h1, w2f, b2f)

    # Reduce BN2 stats and fold BN2 into (w3, b3).
    w3f, b3f = _bn_fold(s2, q2, params["g2"], params["be2"],
                        params["w3"], params["b3"], B)

    # --------- pass 3: out = bn2(h2) @ w3 + b3 via folded weights (lane-dense) ----------
    out = pl.pallas_call(
        _linear_kernel,
        out_shape=jax.ShapeDtypeStruct((B_pad, Op), jnp.float32),
        grid=(nt,),
        in_specs=[h_spec, const_spec((Hp, Op)), const_spec((1, Op))],
        out_specs=pl.BlockSpec((TB, Op), lambda i: (i, 0)),
        compiler_params=cparams,
        cost_estimate=pl.CostEstimate(
            flops=2 * B_pad * Hp * Op, transcendentals=0,
            bytes_accessed=2 * (B_pad * Hp + Hp * Op) + 4 * B_pad * Op),
    )(h2, w3f, b3f)

    return out[:B, :2]


# ------------------------------------ parameters ----------------------------------------
def init_params(key, input_dim, hidden_dim):
    """Raw (unpadded) parameters with PyTorch default-init semantics, (in, out) layout."""
    ks = jax.random.split(key, 3)

    def lin(kw, fan_in, fan_out):
        bound = 1.0 / jnp.sqrt(fan_in)
        kw1, kw2 = jax.random.split(kw)
        w = jax.random.uniform(kw1, (fan_in, fan_out), jnp.float32, -bound, bound)
        bias = jax.random.uniform(kw2, (1, fan_out), jnp.float32, -bound, bound)
        return w, bias

    w1, b1 = lin(ks[0], input_dim, hidden_dim)
    w2, b2 = lin(ks[1], hidden_dim, hidden_dim)
    w3, b3 = lin(ks[2], hidden_dim, 2)
    ones = jnp.ones((1, hidden_dim), jnp.float32)
    zeros = jnp.zeros((1, hidden_dim), jnp.float32)
    return {"w1": w1, "b1": b1, "g1": ones, "be1": zeros,
            "w2": w2, "b2": b2, "g2": ones, "be2": zeros,
            "w3": w3, "b3": b3}


def prepare_params(raw, lane=LANE):
    """One-time padding / casting, outside the per-call path.

    Feature dims are zero-padded to lane multiples (padded columns stay exactly 0 through
    the whole pipeline).  w1 is pre-cast to bf16 (fed straight to the MXU).  w2 / w3 stay
    f32: they are re-folded with the batch-dependent BN affine each forward and cast to
    bf16 by that tiny wrapper op (only the folded bf16 copy is DMA'd by the kernels).
    """
    D, H = raw["w1"].shape
    Hp = _round_up(H, lane)
    Op = _round_up(raw["w3"].shape[1], lane)
    vec = lambda v, n: _pad2d(v, 1, n)
    return {
        "w1": _pad2d(raw["w1"], D, Hp).astype(jnp.bfloat16),
        "b1": vec(raw["b1"], Hp), "g1": vec(raw["g1"], Hp), "be1": vec(raw["be1"], Hp),
        "w2": _pad2d(raw["w2"], Hp, Hp),
        "b2": vec(raw["b2"], Hp), "g2": vec(raw["g2"], Hp), "be2": vec(raw["be2"], Hp),
        "w3": _pad2d(raw["w3"], Hp, Op),
        "b3": vec(raw["b3"], Op),
    }


# ------------------------------------ references ----------------------------------------
def _bn_ref(h, g, be):
    m = h.mean(0, keepdims=True)
    v = ((h - m) ** 2).mean(0, keepdims=True)
    return (h - m) / jnp.sqrt(v + EPS) * g + be


def reference_forward(x, p):
    """Pure-f32 reference (PyTorch training-mode semantics), raw params."""
    h = jnp.maximum(x @ p["w1"] + p["b1"], 0.0)
    h = _bn_ref(h, p["g1"], p["be1"])
    h = jnp.maximum(h @ p["w2"] + p["b2"], 0.0)
    h = _bn_ref(h, p["g2"], p["be2"])
    return h @ p["w3"] + p["b3"]


def reference_forward_kernel_numerics(x, p, n):
    """Pure-JAX mirror of the kernel's numeric path (bf16 operands, folded BN), prepared params."""
    def dot(a, b):
        return jnp.dot(a.astype(jnp.bfloat16), b, preferred_element_type=jnp.float32)

    h1 = jnp.maximum(dot(x, p["w1"]) + p["b1"], 0.0)
    s1 = h1.sum(0, keepdims=True)[None]
    q1 = (h1 * h1).sum(0, keepdims=True)[None]
    w2f, b2f = _bn_fold(s1, q1, p["g1"], p["be1"], p["w2"], p["b2"], n)
    h2 = jnp.maximum(dot(h1, w2f) + b2f, 0.0)
    s2 = h2.sum(0, keepdims=True)[None]
    q2 = (h2 * h2).sum(0, keepdims=True)[None]
    w3f, b3f = _bn_fold(s2, q2, p["g2"], p["be2"], p["w3"], p["b3"], n)
    return (dot(h2, w3f) + b3f)[:, :2]


if __name__ == "__main__":
    key = jax.random.PRNGKey(0)
    k_x, k_p = jax.random.split(key)

    # Small demo shapes; batch=128 with tile_batch=32 exercises 4 batch tiles and the
    # cross-tile (per-tile partial) BatchNorm stats reduction.
    batch, input_dim, hidden_dim = 128, 32, 32
    x = jax.random.normal(k_x, (batch, input_dim), jnp.float32)
    raw = init_params(k_p, input_dim, hidden_dim)
    params = prepare_params(raw)   # one-time pad / bf16 cast, outside the per-call path

    out = meta_classifier_forward(x, params, tile_batch=32)
    jax.block_until_ready(out)
    assert out.shape == (batch, 2)

    # Tight check against a pure-JAX mirror of the kernel numerics (bf16 / folded BN).
    ref_mirror = reference_forward_kernel_numerics(x, params, batch)
    assert jnp.allclose(out, ref_mirror, atol=2e-2, rtol=2e-2), (
        float(jnp.max(jnp.abs(out - ref_mirror))))
    # Loose sanity check against the full-f32 PyTorch-semantics reference.
    ref_f32 = reference_forward(x, raw)
    assert jnp.allclose(out, ref_f32, atol=1e-1, rtol=1e-1), (
        float(jnp.max(jnp.abs(out - ref_f32))))

    # Non-divisible batch: exercises the masked tail tile + default tile selection.
    xb = x[:100]
    outb = meta_classifier_forward(xb, params)
    jax.block_until_ready(outb)
    assert outb.shape == (100, 2)
    refb = reference_forward(xb, raw)
    assert jnp.allclose(outb, refb, atol=1e-1, rtol=1e-1), (
        float(jnp.max(jnp.abs(outb - refb))))

    print("KERNEL_OK")
</pallas_src>

<mosaic_0001>
module attributes {stable_mosaic.version = 11 : i64} {
  func.func @_linear_relu_stats_kernel(%arg0: i32, %arg1: memref<32x32xf32, #tpu.memory_space<vmem>>, %arg2: memref<32x128xbf16, #tpu.memory_space<vmem>>, %arg3: memref<1x128xf32, #tpu.memory_space<vmem>>, %arg4: memref<32x128xbf16, #tpu.memory_space<vmem>>, %arg5: memref<1x1x128xf32, #tpu.memory_space<vmem>>, %arg6: memref<1x1x128xf32, #tpu.memory_space<vmem>>) attributes {dimension_semantics = [#tpu.dimension_semantics<parallel>], iteration_bounds = array<i64: 4>, scalar_prefetch = 0 : i64, scratch_operands = 0 : i64, tpu.core_type = #tpu.core_type<tc>, window_params = [{transform_indices = @transform_0, window_bounds = array<i64: 32, 32>}, {pipeline_mode = #tpu.pipeline_mode<synchronous>, transform_indices = @transform_1, window_bounds = array<i64: 32, 128>}, {pipeline_mode = #tpu.pipeline_mode<synchronous>, transform_indices = @transform_2, window_bounds = array<i64: 1, 128>}, {transform_indices = @transform_3, window_bounds = array<i64: 32, 128>}, {transform_indices = @transform_4, window_bounds = array<i64: 1, 1, 128>}, {transform_indices = @transform_5, window_bounds = array<i64: 1, 1, 128>}]} {
    %c0 = arith.constant 0 : index
    %c0_0 = arith.constant 0 : index
    %0 = vector.load %arg1[%c0, %c0_0] : memref<32x32xf32, #tpu.memory_space<vmem>>, vector<32x32xf32>
    %1 = arith.truncf %0 : vector<32x32xf32> to vector<32x32xbf16>
    %c0_1 = arith.constant 0 : index
    %c0_2 = arith.constant 0 : index
    %2 = vector.load %arg2[%c0_1, %c0_2] : memref<32x128xbf16, #tpu.memory_space<vmem>>, vector<32x128xbf16>
    %cst = arith.constant dense<0.000000e+00> : vector<32x128xf32>
    %3 = tpu.matmul %1, %2, %cst {dimension_numbers = #tpu.dot_dimension_numbers<[1], [0], [0], [1], [0, 0, 1, 1], [], []>} : vector<32x32xbf16>, vector<32x128xbf16>, vector<32x128xf32> -> vector<32x128xf32>
    %c0_3 = arith.constant 0 : index
    %c0_4 = arith.constant 0 : index
    %4 = vector.load %arg3[%c0_3, %c0_4] : memref<1x128xf32, #tpu.memory_space<vmem>>, vector<1x128xf32>
    %5 = vector.broadcast %4 : vector<1x128xf32> to vector<32x128xf32>
    %6 = arith.addf %3, %5 : vector<32x128xf32>
    %cst_5 = arith.constant 0.000000e+00 : f32
    %7 = vector.broadcast %cst_5 : f32 to vector<32x128xf32>
    %8 = arith.maximumf %6, %7 : vector<32x128xf32>
    %9 = arith.truncf %8 : vector<32x128xf32> to vector<32x128xbf16>
    %c0_6 = arith.constant 0 : index
    %c0_7 = arith.constant 0 : index
    %10 = vector.load %arg4[%c0_6, %c0_7] : memref<32x128xbf16, #tpu.memory_space<vmem>>, vector<32x128xbf16>
    tpu.vector_store %arg4[%c0_6, %c0_7], %9 {strides = array<i32>} : memref<32x128xbf16, #tpu.memory_space<vmem>>, vector<32x128xbf16>,
    %cst_8 = arith.constant dense<0.000000e+00> : vector<128xf32>
    %11 = vector.multi_reduction <add>, %8, %cst_8 [0] : vector<32x128xf32> to vector<128xf32>
    %12 = vector.shape_cast %11 : vector<128xf32> to vector<1x128xf32>
    %13 = vector.shape_cast %12 : vector<1x128xf32> to vector<1x1x128xf32>
    %c0_9 = arith.constant 0 : index
    %c0_10 = arith.constant 0 : index
    %c0_11 = arith.constant 0 : index
    %14 = vector.load %arg5[%c0_9, %c0_10, %c0_11] : memref<1x1x128xf32, #tpu.memory_space<vmem>>, vector<1x1x128xf32>
    tpu.vector_store %arg5[%c0_9, %c0_10, %c0_11], %13 {strides = array<i32>} : memref<1x1x128xf32, #tpu.memory_space<vmem>>, vector<1x1x128xf32>,
    %15 = arith.mulf %8, %8 : vector<32x128xf32>
    %cst_12 = arith.constant dense<0.000000e+00> : vector<128xf32>
    %16 = vector.multi_reduction <add>, %15, %cst_12 [0] : vector<32x128xf32> to vector<128xf32>
    %17 = vector.shape_cast %16 : vector<128xf32> to vector<1x128xf32>
    %18 = vector.shape_cast %17 : vector<1x128xf32> to vector<1x1x128xf32>
    %c0_13 = arith.constant 0 : index
    %c0_14 = arith.constant 0 : index
    %c0_15 = arith.constant 0 : index
    %19 = vector.load %arg6[%c0_13, %c0_14, %c0_15] : memref<1x1x128xf32, #tpu.memory_space<vmem>>, vector<1x1x128xf32>
    tpu.vector_store %arg6[%c0_13, %c0_14, %c0_15], %18 {strides = array<i32>} : memref<1x1x128xf32, #tpu.memory_space<vmem>>, vector<1x1x128xf32>,
    return
  }
  func.func @transform_0(%arg0: i32) -> (i32, i32) {
    %c0_i32 = arith.constant 0 : i32
    %c0_i32_0 = arith.constant 0 : i32
    return %arg0, %c0_i32 : i32, i32
  }
  func.func @transform_1(%arg0: i32) -> (i32, i32) {
    %c0_i32 = arith.constant 0 : i32
    %c0_i32_0 = arith.constant 0 : i32
    %c0_i32_1 = arith.constant 0 : i32
    return %c0_i32, %c0_i32_0 : i32, i32
  }
  func.func @transform_2(%arg0: i32) -> (i32, i32) {
    %c0_i32 = arith.constant 0 : i32
    %c0_i32_0 = arith.constant 0 : i32
    %c0_i32_1 = arith.constant 0 : i32
    return %c0_i32, %c0_i32_0 : i32, i32
  }
  func.func @transform_3(%arg0: i32) -> (i32, i32) {
    %c0_i32 = arith.constant 0 : i32
    %c0_i32_0 = arith.constant 0 : i32
    return %arg0, %c0_i32 : i32, i32
  }
  func.func @transform_4(%arg0: i32) -> (i32, i32, i32) {
    %c0_i32 = arith.constant 0 : i32
    %c0_i32_0 = arith.constant 0 : i32
    %c0_i32_1 = arith.constant 0 : i32
    return %arg0, %c0_i32, %c0_i32_0 : i32, i32, i32
  }
  func.func @transform_5(%arg0: i32) -> (i32, i32, i32) {
    %c0_i32 = arith.constant 0 : i32
    %c0_i32_0 = arith.constant 0 : i32
    %c0_i32_1 = arith.constant 0 : i32
    return %arg0, %c0_i32, %c0_i32_0 : i32, i32, i32
  }
}

module attributes {stable_mosaic.version = 11 : i64} {
  func.func @_linear_kernel(%arg0: i32, %arg1: memref<32x128xbf16, #tpu.memory_space<vmem>>, %arg2: memref<128x128xbf16, #tpu.memory_space<vmem>>, %arg3: memref<1x128xf32, #tpu.memory_space<vmem>>, %arg4: memref<32x128xf32, #tpu.memory_space<vmem>>) attributes {dimension_semantics = [#tpu.dimension_semantics<parallel>], iteration_bounds = array<i64: 4>, scalar_prefetch = 0 : i64, scratch_operands = 0 : i64, tpu.core_type = #tpu.core_type<tc>, window_params = [{transform_indices = @transform_0, window_bounds = array<i64: 32, 128>}, {pipeline_mode = #tpu.pipeline_mode<synchronous>, transform_indices = @transform_1, window_bounds = array<i64: 128, 128>}, {pipeline_mode = #tpu.pipeline_mode<synchronous>, transform_indices = @transform_2, window_bounds = array<i64: 1, 128>}, {transform_indices = @transform_3, window_bounds = array<i64: 32, 128>}]} {
    %c0 = arith.constant 0 : index
    %c0_0 = arith.constant 0 : index
    %0 = vector.load %arg1[%c0, %c0_0] : memref<32x128xbf16, #tpu.memory_space<vmem>>, vector<32x128xbf16>
    %c0_1 = arith.constant 0 : index
    %c0_2 = arith.constant 0 : index
    %1 = vector.load %arg2[%c0_1, %c0_2] : memref<128x128xbf16, #tpu.memory_space<vmem>>, vector<128x128xbf16>
    %cst = arith.constant dense<0.000000e+00> : vector<32x128xf32>
    %2 = tpu.matmul %0, %1, %cst {dimension_numbers = #tpu.dot_dimension_numbers<[1], [0], [0], [1], [0, 0, 1, 1], [], []>} : vector<32x128xbf16>, vector<128x128xbf16>, vector<32x128xf32> -> vector<32x128xf32>
    %c0_3 = arith.constant 0 : index
    %c0_4 = arith.constant 0 : index
    %3 = vector.load %arg3[%c0_3, %c0_4] : memref<1x128xf32, #tpu.memory_space<vmem>>, vector<1x128xf32>
    %4 = vector.broadcast %3 : vector<1x128xf32> to vector<32x128xf32>
    %5 = arith.addf %2, %4 : vector<32x128xf32>
    %c0_5 = arith.constant 0 : index
    %c0_6 = arith.constant 0 : index
    %6 = vector.load %arg4[%c0_5, %c0_6] : memref<32x128xf32, #tpu.memory_space<vmem>>, vector<32x128xf32>
    tpu.vector_store %arg4[%c0_5, %c0_6], %5 {strides = array<i32>} : memref<32x128xf32, #tpu.memory_space<vmem>>, vector<32x128xf32>,
    return
  }
  func.func @transform_0(%arg0: i32) -> (i32, i32) {
    %c0_i32 = arith.constant 0 : i32
    %c0_i32_0 = arith.constant 0 : i32
    return %arg0, %c0_i32 : i32, i32
  }
  func.func @transform_1(%arg0: i32) -> (i32, i32) {
    %c0_i32 = arith.constant 0 : i32
    %c0_i32_0 = arith.constant 0 : i32
    %c0_i32_1 = arith.constant 0 : i32
    return %c0_i32, %c0_i32_0 : i32, i32
  }
  func.func @transform_2(%arg0: i32) -> (i32, i32) {
    %c0_i32 = arith.constant 0 : i32
    %c0_i32_0 = arith.constant 0 : i32
    %c0_i32_1 = arith.constant 0 : i32
    return %c0_i32, %c0_i32_0 : i32, i32
  }
  func.func @transform_3(%arg0: i32) -> (i32, i32) {
    %c0_i32 = arith.constant 0 : i32
    %c0_i32_0 = arith.constant 0 : i32
    return %arg0, %c0_i32 : i32, i32
  }
}

module attributes {stable_mosaic.version = 11 : i64} {
  func.func @_linear_relu_stats_kernel(%arg0: i32, %arg1: memref<32x128xbf16, #tpu.memory_space<vmem>>, %arg2: memref<128x128xbf16, #tpu.memory_space<vmem>>, %arg3: memref<1x128xf32, #tpu.memory_space<vmem>>, %arg4: memref<32x128xbf16, #tpu.memory_space<vmem>>, %arg5: memref<1x1x128xf32, #tpu.memory_space<vmem>>, %arg6: memref<1x1x128xf32, #tpu.memory_space<vmem>>) attributes {dimension_semantics = [#tpu.dimension_semantics<parallel>], iteration_bounds = array<i64: 4>, scalar_prefetch = 0 : i64, scratch_operands = 0 : i64, tpu.core_type = #tpu.core_type<tc>, window_params = [{transform_indices = @transform_0, window_bounds = array<i64: 32, 128>}, {pipeline_mode = #tpu.pipeline_mode<synchronous>, transform_indices = @transform_1, window_bounds = array<i64: 128, 128>}, {pipeline_mode = #tpu.pipeline_mode<synchronous>, transform_indices = @transform_2, window_bounds = array<i64: 1, 128>}, {transform_indices = @transform_3, window_bounds = array<i64: 32, 128>}, {transform_indices = @transform_4, window_bounds = array<i64: 1, 1, 128>}, {transform_indices = @transform_5, window_bounds = array<i64: 1, 1, 128>}]} {
    %c0 = arith.constant 0 : index
    %c0_0 = arith.constant 0 : index
    %0 = vector.load %arg1[%c0, %c0_0] : memref<32x128xbf16, #tpu.memory_space<vmem>>, vector<32x128xbf16>
    %c0_1 = arith.constant 0 : index
    %c0_2 = arith.constant 0 : index
    %1 = vector.load %arg2[%c0_1, %c0_2] : memref<128x128xbf16, #tpu.memory_space<vmem>>, vector<128x128xbf16>
    %cst = arith.constant dense<0.000000e+00> : vector<32x128xf32>
    %2 = tpu.matmul %0, %1, %cst {dimension_numbers = #tpu.dot_dimension_numbers<[1], [0], [0], [1], [0, 0, 1, 1], [], []>} : vector<32x128xbf16>, vector<128x128xbf16>, vector<32x128xf32> -> vector<32x128xf32>
    %c0_3 = arith.constant 0 : index
    %c0_4 = arith.constant 0 : index
    %3 = vector.load %arg3[%c0_3, %c0_4] : memref<1x128xf32, #tpu.memory_space<vmem>>, vector<1x128xf32>
    %4 = vector.broadcast %3 : vector<1x128xf32> to vector<32x128xf32>
    %5 = arith.addf %2, %4 : vector<32x128xf32>
    %cst_5 = arith.constant 0.000000e+00 : f32
    %6 = vector.broadcast %cst_5 : f32 to vector<32x128xf32>
    %7 = arith.maximumf %5, %6 : vector<32x128xf32>
    %8 = arith.truncf %7 : vector<32x128xf32> to vector<32x128xbf16>
    %c0_6 = arith.constant 0 : index
    %c0_7 = arith.constant 0 : index
    %9 = vector.load %arg4[%c0_6, %c0_7] : memref<32x128xbf16, #tpu.memory_space<vmem>>, vector<32x128xbf16>
    tpu.vector_store %arg4[%c0_6, %c0_7], %8 {strides = array<i32>} : memref<32x128xbf16, #tpu.memory_space<vmem>>, vector<32x128xbf16>,
    %cst_8 = arith.constant dense<0.000000e+00> : vector<128xf32>
    %10 = vector.multi_reduction <add>, %7, %cst_8 [0] : vector<32x128xf32> to vector<128xf32>
    %11 = vector.shape_cast %10 : vector<128xf32> to vector<1x128xf32>
    %12 = vector.shape_cast %11 : vector<1x128xf32> to vector<1x1x128xf32>
    %c0_9 = arith.constant 0 : index
    %c0_10 = arith.constant 0 : index
    %c0_11 = arith.constant 0 : index
    %13 = vector.load %arg5[%c0_9, %c0_10, %c0_11] : memref<1x1x128xf32, #tpu.memory_space<vmem>>, vector<1x1x128xf32>
    tpu.vector_store %arg5[%c0_9, %c0_10, %c0_11], %12 {strides = array<i32>} : memref<1x1x128xf32, #tpu.memory_space<vmem>>, vector<1x1x128xf32>,
    %14 = arith.mulf %7, %7 : vector<32x128xf32>
    %cst_12 = arith.constant dense<0.000000e+00> : vector<128xf32>
    %15 = vector.multi_reduction <add>, %14, %cst_12 [0] : vector<32x128xf32> to vector<128xf32>
    %16 = vector.shape_cast %15 : vector<128xf32> to vector<1x128xf32>
    %17 = vector.shape_cast %16 : vector<1x128xf32> to vector<1x1x128xf32>
    %c0_13 = arith.constant 0 : index
    %c0_14 = arith.constant 0 : index
    %c0_15 = arith.constant 0 : index
    %18 = vector.load %arg6[%c0_13, %c0_14, %c0_15] : memref<1x1x128xf32, #tpu.memory_space<vmem>>, vector<1x1x128xf32>
    tpu.vector_store %arg6[%c0_13, %c0_14, %c0_15], %17 {strides = array<i32>} : memref<1x1x128xf32, #tpu.memory_space<vmem>>, vector<1x1x128xf32>,
    return
  }
  func.func @transform_0(%arg0: i32) -> (i32, i32) {
    %c0_i32 = arith.constant 0 : i32
    %c0_i32_0 = arith.constant 0 : i32
    return %arg0, %c0_i32 : i32, i32
  }
  func.func @transform_1(%arg0: i32) -> (i32, i32) {
    %c0_i32 = arith.constant 0 : i32
    %c0_i32_0 = arith.constant 0 : i32
    %c0_i32_1 = arith.constant 0 : i32
    return %c0_i32, %c0_i32_0 : i32, i32
  }
  func.func @transform_2(%arg0: i32) -> (i32, i32) {
    %c0_i32 = arith.constant 0 : i32
    %c0_i32_0 = arith.constant 0 : i32
    %c0_i32_1 = arith.constant 0 : i32
    return %c0_i32, %c0_i32_0 : i32, i32
  }
  func.func @transform_3(%arg0: i32) -> (i32, i32) {
    %c0_i32 = arith.constant 0 : i32
    %c0_i32_0 = arith.constant 0 : i32
    return %arg0, %c0_i32 : i32, i32
  }
  func.func @transform_4(%arg0: i32) -> (i32, i32, i32) {
    %c0_i32 = arith.constant 0 : i32
    %c0_i32_0 = arith.constant 0 : i32
    %c0_i32_1 = arith.constant 0 : i32
    return %arg0, %c0_i32, %c0_i32_0 : i32, i32, i32
  }
  func.func @transform_5(%arg0: i32) -> (i32, i32, i32) {
    %c0_i32 = arith.constant 0 : i32
    %c0_i32_0 = arith.constant 0 : i32
    %c0_i32_1 = arith.constant 0 : i32
    return %arg0, %c0_i32, %c0_i32_0 : i32, i32, i32
  }
}

</mosaic_0001>

<llo_original>
// kernel: meta_classifier_forward.3
$region0: #{meta_classifier_forward.3}
  #allocation0 [shape = 'u32[]', space=smem, size = 0x4, offset = 0x4, fixed_abs, tag = 'smem constant byte address 0x4 - core index']
  #allocation1 [shape = 'u32[144,128]{1,0:T(1,128)}', space=vmem, size = 0x12000, scoped, tag = 'internal scratch']
  %s0 = inlined_call_operand.vmem [shape: f32[128,32], index: 0, kind: input, shape index: {}]
  %s1 = inlined_call_operand.vmem [shape: bf16[32,128], index: 1, kind: input, shape index: {}]
  %s2 = inlined_call_operand.vmem [shape: f32[1,128], index: 2, kind: input, shape index: {}]
  %s3 = inlined_call_operand.vmem [shape: bf16[128,128], index: 3, kind: output, shape index: {0}]
  %s4 = inlined_call_operand.vmem [shape: f32[4,1,128], index: 4, kind: output, shape index: {1}]
  %s5 = inlined_call_operand.vmem [shape: f32[4,1,128], index: 5, kind: output, shape index: {2}]
  %6 = xla_tuple %s3, %s4, %s5
  %s7 = sld [smem:[#allocation0]]
  $region61: #{meta_classifier_forward.3} parent=0
    _
  %s9 = ssub.s32 1, %s7
  %s10 = scalar_select 0, %s9, %s7
  loop: start=0, step=1, limit=6
  $region2: #{meta_classifier_forward.3} parent=0 // loop_pre_header
    _
  $region3: #{meta_classifier_forward.3} parent=0 // loop_header
    %s12 = sphi 0, %s16
    %p13 = scmp.ge.s32.totalorder %s12, 6
    %s22 = sphi 0, %s24
    %s25 = sphi 0, %s22
    %s26 = sphi 0, %s25
    %s42 = sphi 0, %s26
    %s46 = sphi 0, %s46
    %s48 = sphi 0, %s46
    %s49 = sphi 0, %s48
    %s63 = sphi 0, %s49
    %s67 = sphi 0, %s67
    %s69 = sphi 0, %s67
    %s70 = sphi 0, %s69
    %s84 = sphi 0, %s70
    %s90 = sphi 0, %s92
    %s93 = sphi 0, %s90
    %s94 = sphi 0, %s93
    %s110 = sphi 0, %s94
    %s116 = sphi 0, %s118
    %s119 = sphi 0, %s116
    %s120 = sphi 0, %s119
    %s136 = sphi 0, %s120
    %s142 = sphi 0, %s144
    %s145 = sphi 0, %s142
    %s146 = sphi 0, %s145
    %s162 = sphi 0, %s146
  $region4: #{meta_classifier_forward.3} parent=0 // loop_header_branch
    %15 = sbr.rel (%p13) target = $region8
  $region5: #{meta_classifier_forward.3} parent=0 // loop_body
    %s17 = ssub.s32 %s12, 1
    %s18 = ssub.s32 %s12, 2
    %s19 = sadd.s32 %s12, 1
    %s20 = ssub.s32 %s12, %s19
    %p21 = scmp.eq.s32.totalorder %s20, 0
    %s23 = sadd.s32 %s22, 1
    %s24 = scalar_select %p21, %s22, %s23
    %p27 = pneg %p21
    %p28 = scmp.eq.s32.totalorder %s12, 3
    %p29 = por %p27, %p28
    %p30 = scmp.ne.s32.totalorder %s22, %s25
    %p31 = scmp.eq.s32.totalorder %s12, 0
    %p32 = por %p30, %p31
    %p33 = scmp.ne.s32.totalorder %s22, %s25
    %p34 = scmp.eq.s32.totalorder %s17, 3
    %p35 = por %p33, %p34
    %p36 = scmp.ne.s32.totalorder %s25, %s26
    %p37 = scmp.eq.s32.totalorder %s17, 0
    %p38 = por %p36, %p37
    %p39 = scmp.ne.s32.totalorder %s25, %s26
    %p40 = scmp.eq.s32.totalorder %s18, 3
    %p41 = por %p39, %p40
    %p43 = scmp.ne.s32.totalorder %s26, %s42
    %p44 = scmp.eq.s32.totalorder %s18, 0
    %p45 = por %p43, %p44
    %s47 = sadd.s32 %s46, 1
    %p50 = scmp.eq.s32.totalorder %s12, 3
    %p51 = scmp.ne.s32.totalorder %s46, %s48
    %p52 = scmp.eq.s32.totalorder %s12, 0
    %p53 = por %p51, %p52
    %p54 = scmp.ne.s32.totalorder %s46, %s48
    %p55 = scmp.eq.s32.totalorder %s17, 3
    %p56 = por %p54, %p55
    %p57 = scmp.ne.s32.totalorder %s48, %s49
    %p58 = scmp.eq.s32.totalorder %s17, 0
    %p59 = por %p57, %p58
    %p60 = scmp.ne.s32.totalorder %s48, %s49
    %p61 = scmp.eq.s32.totalorder %s18, 3
    %p62 = por %p60, %p61
    %p64 = scmp.ne.s32.totalorder %s49, %s63
    %p65 = scmp.eq.s32.totalorder %s18, 0
    %p66 = por %p64, %p65
    %s68 = sadd.s32 %s67, 1
    %p71 = scmp.eq.s32.totalorder %s12, 3
    %p72 = scmp.ne.s32.totalorder %s67, %s69
    %p73 = scmp.eq.s32.totalorder %s12, 0
    %p74 = por %p72, %p73
    %p75 = scmp.ne.s32.totalorder %s67, %s69
    %p76 = scmp.eq.s32.totalorder %s17, 3
    %p77 = por %p75, %p76
    %p78 = scmp.ne.s32.totalorder %s69, %s70
    %p79 = scmp.eq.s32.totalorder %s17, 0
    %p80 = por %p78, %p79
    %p81 = scmp.ne.s32.totalorder %s69, %s70
    %p82 = scmp.eq.s32.totalorder %s18, 3
    %p83 = por %p81, %p82
    %p85 = scmp.ne.s32.totalorder %s70, %s84
    %p86 = scmp.eq.s32.totalorder %s18, 0
    %p87 = por %p85, %p86
    %s88 = ssub.s32 %s12, %s19
    %p89 = scmp.eq.s32.totalorder %s88, 0
    %s91 = sadd.s32 %s90, 1
    %s92 = scalar_select %p89, %s90, %s91
    %p95 = pneg %p89
    %p96 = scmp.eq.s32.totalorder %s12, 3
    %p97 = por %p95, %p96
    %p98 = scmp.ne.s32.totalorder %s90, %s93
    %p99 = scmp.eq.s32.totalorder %s12, 0
    %p100 = por %p98, %p99
    %p101 = scmp.ne.s32.totalorder %s90, %s93
    %p102 = scmp.eq.s32.totalorder %s17, 3
    %p103 = por %p101, %p102
    %p104 = scmp.ne.s32.totalorder %s93, %s94
    %p105 = scmp.eq.s32.totalorder %s17, 0
    %p106 = por %p104, %p105
    %p107 = scmp.ne.s32.totalorder %s93, %s94
    %p108 = scmp.eq.s32.totalorder %s18, 3
    %p109 = por %p107, %p108
    %p111 = scmp.ne.s32.totalorder %s94, %s110
    %p112 = scmp.eq.s32.totalorder %s18, 0
    %p113 = por %p111, %p112
    %s114 = ssub.s32 %s12, %s19
    %p115 = scmp.eq.s32.totalorder %s114, 0
    %s117 = sadd.s32 %s116, 1
    %s118 = scalar_select %p115, %s116, %s117
    %p121 = pneg %p115
    %p122 = scmp.eq.s32.totalorder %s12, 3
    %p123 = por %p121, %p122
    %p124 = scmp.ne.s32.totalorder %s116, %s119
    %p125 = scmp.eq.s32.totalorder %s12, 0
    %p126 = por %p124, %p125
    %p127 = scmp.ne.s32.totalorder %s116, %s119
    %p128 = scmp.eq.s32.totalorder %s17, 3
    %p129 = por %p127, %p128
    %p130 = scmp.ne.s32.totalorder %s119, %s120
    %p131 = scmp.eq.s32.totalorder %s17, 0
    %p132 = por %p130, %p131
    %p133 = scmp.ne.s32.totalorder %s119, %s120
    %p134 = scmp.eq.s32.totalorder %s18, 3
    %p135 = por %p133, %p134
    %p137 = scmp.ne.s32.totalorder %s120, %s136
    %p138 = scmp.eq.s32.totalorder %s18, 0
    %p139 = por %p137, %p138
    %s140 = ssub.s32 %s12, %s19
    %p141 = scmp.eq.s32.totalorder %s140, 0
    %s143 = sadd.s32 %s142, 1
    %s144 = scalar_select %p141, %s142, %s143
    %p147 = pneg %p141
    %p148 = scmp.eq.s32.totalorder %s12, 3
    %p149 = por %p147, %p148
    %p150 = scmp.ne.s32.totalorder %s142, %s145
    %p151 = scmp.eq.s32.totalorder %s12, 0
    %p152 = por %p150, %p151
    %p153 = scmp.ne.s32.totalorder %s142, %s145
    %p154 = scmp.eq.s32.totalorder %s17, 3
    %p155 = por %p153, %p154
    %p156 = scmp.ne.s32.totalorder %s145, %s146
    %p157 = scmp.eq.s32.totalorder %s17, 0
    %p158 = por %p156, %p157
    %p159 = scmp.ne.s32.totalorder %s145, %s146
    %p160 = scmp.eq.s32.totalorder %s18, 3
    %p161 = por %p159, %p160
    %p163 = scmp.ne.s32.totalorder %s146, %s162
    %p164 = scmp.eq.s32.totalorder %s18, 0
    %p165 = por %p163, %p164
    %p166 = scmp.le.s32.totalorder 1, %s12
    %p167 = scmp.lt.s32.totalorder %s12, 5
    %p168 = pnand %p166, %p167
    %p169 = pneg %p168
    // Predicated region
    $region9: #{meta_classifier_forward.3} parent=5 // pred_check
      _
    $region10: #{meta_classifier_forward.3} parent=5 // pred_check_branch
      %171 = sbr.rel (%p168) target = $region12
    $region11: #{meta_classifier_forward.3} parent=5 // pred_region
      %s172 = ssub.s32 %s12, 1
      // Predicated region
      $region13: #{meta_classifier_forward.3} parent=11 // pred_check
        %p173 = pneg %p59
      $region14: #{meta_classifier_forward.3} parent=11 // pred_check_branch
        %175 = sbr.rel (%p173) target = $region16
      $region15: #{meta_classifier_forward.3} parent=11 // pred_region
        _
      $region16: #{meta_classifier_forward.3} parent=11 // pred_fallthru
        _
      // Predicated region
      $region17: #{meta_classifier_forward.3} parent=11 // pred_check
        %p176 = pneg %p80
      $region18: #{meta_classifier_forward.3} parent=11 // pred_check_branch
        %178 = sbr.rel (%p176) target = $region20
      $region19: #{meta_classifier_forward.3} parent=11 // pred_region
        _
      $region20: #{meta_classifier_forward.3} parent=11 // pred_fallthru
        _
    $region12: #{meta_classifier_forward.3} parent=5 // pred_fallthru
      _
    %p179 = scmp.lt.s32.totalorder %s12, 4
    // Predicated region
    $region21: #{meta_classifier_forward.3} parent=5 // pred_check
      %p180 = pneg %p179
    $region22: #{meta_classifier_forward.3} parent=5 // pred_check_branch
      %182 = sbr.rel (%p180) target = $region24
    $region23: #{meta_classifier_forward.3} parent=5 // pred_region
      // Predicated region
      $region25: #{meta_classifier_forward.3} parent=23 // pred_check
        %p183 = pneg %p32
      $region26: #{meta_classifier_forward.3} parent=23 // pred_check_branch
        %185 = sbr.rel (%p183) target = $region28
      $region27: #{meta_classifier_forward.3} parent=23 // pred_region
        %s186 = smul.u32 4, %s12
        %p187 = scmp.lt.s32.totalorder %s186, 15
        %s188 = scalar_select %p187, %s186, 15
        %s189 = smul.addr %s188, 8
        %s190 = scalar_lea.vmem %s0, %s189
        %s191 = smul.u32 4, %s12
      $region28: #{meta_classifier_forward.3} parent=23 // pred_fallthru
        _
    $region24: #{meta_classifier_forward.3} parent=5 // pred_fallthru
      _
    %p192 = scmp.le.s32.totalorder 1, %s12
    %p193 = scmp.lt.s32.totalorder %s12, 5
    %p194 = pnand %p192, %p193
    %p195 = pneg %p194
    // Predicated region
    $region29: #{meta_classifier_forward.3} parent=5 // pred_check
      _
    $region30: #{meta_classifier_forward.3} parent=5 // pred_check_branch
      %197 = sbr.rel (%p194) target = $region32
    $region31: #{meta_classifier_forward.3} parent=5 // pred_region
      %s198 = ssub.s32 %s12, 1
      %s199 = smul.u32 4, %s17
      %p200 = scmp.lt.s32.totalorder %s199, 15
      %s201 = scalar_select %p200, %s199, 15
      %s202 = smul.addr %s201, 8
      %s203 = scalar_lea.vmem %s0, %s202
      %p204 = pneg %p38
      %p205 = pneg %p35
      %p206 = pneg %p59
      %p207 = pneg %p56
      %p208 = pneg %p80
      %p209 = pneg %p77
      %p210 = pneg %p106
      %p211 = pneg %p103
      %s212 = smul.u32 4, %s17
      %p213 = scmp.lt.s32.totalorder %s212, 15
      %s214 = scalar_select %p213, %s212, 15
      %s215 = smul.addr %s214, 4
      %s216 = scalar_lea.vmem %s3, %s215
      %p217 = pneg %p132
      %p218 = pneg %p129
      %p219 = scmp.lt.s32.totalorder %s17, 3
      %s220 = scalar_select %p219, %s17, 3
      %s221 = scalar_lea.vmem %s4, %s220
      %p222 = pneg %p158
      %p223 = pneg %p155
      %p224 = scmp.lt.s32.totalorder %s17, 3
      %s225 = scalar_select %p224, %s17, 3
      %s226 = scalar_lea.vmem %s5, %s225
      %s227 = smul.u32 4, %s17
      %p228 = scmp.lt.s32.totalorder %s227, 15
      %s229 = scalar_select %p228, %s227, 15
      %s230 = smul.addr %s229, 8
      %s231 = scalar_lea.vmem %s0, %s230
      %s232 = smul.u32 4, %s17
      %s233 = smul.u32 4, %s17
      %p234 = scmp.lt.s32.totalorder %s233, 15
      %s235 = scalar_select %p234, %s233, 15
      %s236 = smul.addr %s235, 4
      %s237 = scalar_lea.vmem %s3, %s236
      %s238 = smul.u32 4, %s17
      %p239 = scmp.lt.s32.totalorder %s17, 3
      %s240 = scalar_select %p239, %s17, 3
      %s241 = scalar_lea.vmem %s4, %s240
      %p242 = scmp.lt.s32.totalorder %s17, 3
      %s243 = scalar_select %p242, %s17, 3
      %s244 = scalar_lea.vmem %s5, %s243
      %v246 = vld [vmem:[%s231] sm:$0xff]
      %v247 = vld [vmem:[%s231 + $0x8] sm:$0xff]
      %v248 = vld [vmem:[%s231 + $0x10] sm:$0xff]
      %v249 = vld [vmem:[%s231 + $0x18] sm:$0xff]
      %v250 = vpack.c.bf16 %v247, %v246
      %v251 = vpack.c.bf16 %v249, %v248
      %v252 = vld [vmem:[%s1] sm:$0xf]
      %v253 = vld [vmem:[%s1 + $0x4] sm:$0xf]
      %v254 = vld [vmem:[%s1 + $0x8] sm:$0xf]
      %v255 = vld [vmem:[%s1 + $0xc] sm:$0xf]
      %v256 = vld [vmem:[%s2] sm:$0x1]
      %v258 = vlaneseq
      %v259 = vshrl.u32 %v258, 7
      %v260 = vsub.s32 0, %v259
      %v261 = vrot.slane %v256, %v260
      %v267 = vunpack.c.l.b16 %v252
      %v268 = vunpack.c.l.b16 %v253
      %v269 = vunpack.c.l.b16 %v254
      %v270 = vunpack.c.l.b16 %v255
      %v271 = vpack.c.b16 %v268, %v267
      %v272 = vpack.c.b16 %v270, %v269
      %vm275 = vcmask 261120
      %v277 = vsel %vm275, %v250, 0
      %v280 = vsel %vm275, %v251, 0
      %282 = vmatprep.subr.bf16.mxu0 0
      %283 = vmatpush1.bf16.msra.mxu0 %v271
      %284 = vmatprep.subr.bf16.mxu0 0
      %285 = vmatpush1.bf16.msra.mxu0 %v272
      %286 = vmatprep.subr.bf16.mxu0 0
      %287 = vmatpush1.bf16.msra.mxu0 0
      %288 = vmatprep.subr.bf16.mxu0 0
      %289 = vmatpush1.bf16.msra.mxu0 0
      %290 = vmatprep.subr.bf16.mxu0 0
      %291 = vmatpush1.bf16.msra.mxu0 0
      %292 = vmatprep.subr.bf16.mxu0 0
      %293 = vmatpush1.bf16.msra.mxu0 0
      %294 = vmatprep.subr.bf16.mxu0 0
      %295 = vmatpush1.bf16.msra.mxu0 0
      %296 = vmatprep.subr.bf16.mxu0 0
      %297 = vmatpush1.bf16.msra.mxu0 0
      %298 = vmatprep.subr.bf16.mxu0 0
      %299 = vmatpush1.bf16.msra.mxu0 0
      %300 = vmatprep.subr.bf16.mxu0 0
      %301 = vmatpush1.bf16.msra.mxu0 0
      %302 = vmatprep.subr.bf16.mxu0 0
      %303 = vmatpush1.bf16.msra.mxu0 0
      %304 = vmatprep.subr.bf16.mxu0 0
      %305 = vmatpush1.bf16.msra.mxu0 0
      %306 = vmatprep.subr.bf16.mxu0 0
      %307 = vmatpush1.bf16.msra.mxu0 0
      %308 = vmatprep.subr.bf16.mxu0 0
      %309 = vmatpush1.bf16.msra.mxu0 0
      %310 = vmatprep.subr.bf16.mxu0 0
      %311 = vmatpush1.bf16.msra.mxu0 0
      %312 = vmatprep.subr.bf16.mxu0 0
      %313 = vmatpush1.bf16.msra.mxu0 0
      %314 = vmatprep.mubr.bf16.mxu0 0
      %315 = vmatmul.mubr.bf16.gmra.mrb[0].mxu0 %v277
      %v316 = vpop.f32.mrb[0].mxu0
      %v317 = vadd.f32 %v261, %v316
      %v318 = vpop.f32.mrb[0].mxu0
      %v319 = vpop.f32.mrb[0].mxu0
      %v320 = vadd.f32 %v261, %v319
      %v321 = vpop.f32.mrb[0].mxu0
      %322 = vmatprep.mubr.bf16.mxu0 0
      %323 = vmatmul.mubr.bf16.gmra.mrb[0].mxu0 %v280
      %v324 = vpop.f32.mrb[0].mxu0
      %v325 = vadd.f32 %v261, %v324
      %v326 = vpop.f32.mrb[0].mxu0
      %v327 = vpop.f32.mrb[0].mxu0
      %v328 = vadd.f32 %v261, %v327
      %v329 = vpop.f32.mrb[0].mxu0
      %330 = vdwg.mxu0
      %v331 = vmax.f32 %v317, 0.0
      %v332 = vmax.f32 %v320, 0.0
      %v333 = vmax.f32 %v325, 0.0
      %v334 = vmax.f32 %v328, 0.0
      %v335 = vpack.c.bf16 %v332, %v331
      %v336 = vpack.c.bf16 %v334, %v333
      %v339 = vunpack.c.l.b16 %v335
      %v340 = vunpack.c.h.b16 %v335
      %v341 = vunpack.c.l.b16 %v336
      %v342 = vunpack.c.h.b16 %v336
      %v343 = vpack.c.b16 %v339, %v339
      %v344 = vpack.c.b16 %v340, %v340
      %v345 = vpack.c.b16 %v341, %v341
      %v346 = vpack.c.b16 %v342, %v342
      %351 = vst [vmem:[%s237] sm:$0xf] %v343
      %352 = vst [vmem:[%s237 + $0x4] sm:$0xf] %v344
      %353 = vst [vmem:[%s237 + $0x8] sm:$0xf] %v345
      %354 = vst [vmem:[%s237 + $0xc] sm:$0xf] %v346
      %v355 = vadd.f32 %v331, %v332
      %v356 = vadd.f32 %v355, %v333
      %v357 = vadd.f32 %v356, %v334
      %v358 = vrot.slane %v357, 4
      %v359 = vadd.f32 %v357, %v358
      %v360 = vrot.slane %v359, 2
      %v361 = vadd.f32 %v359, %v360
      %v362 = vrot.slane %v361, 1
      %v363 = vadd.f32 %v361, %v362
      %364 = vst [vmem:[%s241] sm:$0x1] %v363
      %v365 = vmul.f32 %v331, %v331
      %v366 = vmul.f32 %v332, %v332
      %v367 = vmul.f32 %v333, %v333
      %v368 = vmul.f32 %v334, %v334
      %v369 = vadd.f32 %v365, %v366
      %v370 = vadd.f32 %v369, %v367
      %v371 = vadd.f32 %v370, %v368
      %v372 = vrot.slane %v371, 4
      %v373 = vadd.f32 %v371, %v372
      %v374 = vrot.slane %v373, 2
      %v375 = vadd.f32 %v373, %v374
      %v376 = vrot.slane %v375, 1
      %v377 = vadd.f32 %v375, %v376
      %378 = vst [vmem:[%s244] sm:$0x1] %v377
      %s379 = smul.u32 4, %s17
      %p380 = scmp.lt.s32.totalorder %s379, 15
      %s381 = scalar_select %p380, %s379, 15
      %s382 = smul.addr %s381, 4
      %s383 = scalar_lea.vmem %s3, %s382
      %p384 = scmp.lt.s32.totalorder %s17, 3
      %s385 = scalar_select %p384, %s17, 3
      %s386 = scalar_lea.vmem %s4, %s385
      %p387 = scmp.lt.s32.totalorder %s17, 3
      %s388 = scalar_select %p387, %s17, 3
      %s389 = scalar_lea.vmem %s5, %s388
      // Predicated region
      $region33: #{meta_classifier_forward.3} parent=31 // pred_check
        %p390 = pneg %p103
      $region34: #{meta_classifier_forward.3} parent=31 // pred_check_branch
        %392 = sbr.rel (%p390) target = $region36
      $region35: #{meta_classifier_forward.3} parent=31 // pred_region
        %s393 = smul.u32 4, %s17
      $region36: #{meta_classifier_forward.3} parent=31 // pred_fallthru
        _
      // Predicated region
      $region37: #{meta_classifier_forward.3} parent=31 // pred_check
        %p394 = pneg %p129
      $region38: #{meta_classifier_forward.3} parent=31 // pred_check_branch
        %396 = sbr.rel (%p394) target = $region40
      $region39: #{meta_classifier_forward.3} parent=31 // pred_region
        _
      $region40: #{meta_classifier_forward.3} parent=31 // pred_fallthru
        _
      // Predicated region
      $region41: #{meta_classifier_forward.3} parent=31 // pred_check
        %p397 = pneg %p155
      $region42: #{meta_classifier_forward.3} parent=31 // pred_check_branch
        %399 = sbr.rel (%p397) target = $region44
      $region43: #{meta_classifier_forward.3} parent=31 // pred_region
        _
      $region44: #{meta_classifier_forward.3} parent=31 // pred_fallthru
        _
    $region32: #{meta_classifier_forward.3} parent=5 // pred_fallthru
      _
    %p400 = scmp.le.s32.totalorder 2, %s12
    // Predicated region
    $region45: #{meta_classifier_forward.3} parent=5 // pred_check
      %p401 = pneg %p400
    $region46: #{meta_classifier_forward.3} parent=5 // pred_check_branch
      %403 = sbr.rel (%p401) target = $region48
    $region47: #{meta_classifier_forward.3} parent=5 // pred_region
      %s404 = ssub.s32 %s12, 2
      // Predicated region
      $region49: #{meta_classifier_forward.3} parent=47 // pred_check
        %p405 = pneg %p109
      $region50: #{meta_classifier_forward.3} parent=47 // pred_check_branch
        %407 = sbr.rel (%p405) target = $region52
      $region51: #{meta_classifier_forward.3} parent=47 // pred_region
        %s408 = smul.u32 4, %s18
        %p409 = scmp.lt.s32.totalorder %s408, 15
        %s410 = scalar_select %p409, %s408, 15
        %s411 = smul.addr %s410, 4
        %s412 = scalar_lea.vmem %s3, %s411
      $region52: #{meta_classifier_forward.3} parent=47 // pred_fallthru
        _
      // Predicated region
      $region53: #{meta_classifier_forward.3} parent=47 // pred_check
        %p413 = pneg %p135
      $region54: #{meta_classifier_forward.3} parent=47 // pred_check_branch
        %415 = sbr.rel (%p413) target = $region56
      $region55: #{meta_classifier_forward.3} parent=47 // pred_region
        %p416 = scmp.lt.s32.totalorder %s18, 3
        %s417 = scalar_select %p416, %s18, 3
        %s418 = scalar_lea.vmem %s4, %s417
      $region56: #{meta_classifier_forward.3} parent=47 // pred_fallthru
        _
      // Predicated region
      $region57: #{meta_classifier_forward.3} parent=47 // pred_check
        %p419 = pneg %p161
      $region58: #{meta_classifier_forward.3} parent=47 // pred_check_branch
        %421 = sbr.rel (%p419) target = $region60
      $region59: #{meta_classifier_forward.3} parent=47 // pred_region
        %p422 = scmp.lt.s32.totalorder %s18, 3
        %s423 = scalar_select %p422, %s18, 3
        %s424 = scalar_lea.vmem %s5, %s423
      $region60: #{meta_classifier_forward.3} parent=47 // pred_fallthru
        _
    $region48: #{meta_classifier_forward.3} parent=5 // pred_fallthru
      _
  $region6: #{meta_classifier_forward.3} parent=0 // loop_footer
    %s16 = sadd.s32 1, %s12
  $region7: #{meta_classifier_forward.3} parent=0 // loop_footer_branch
    %11 = sbr.rel target = $region3
  $region8: #{meta_classifier_forward.3} parent=0 // loop_exit
    _

// kernel: meta_classifier_forward.5
$region0: #{meta_classifier_forward.5}
  #allocation0 [shape = 'u32[]', space=smem, size = 0x4, offset = 0x4, fixed_abs, tag = 'smem constant byte address 0x4 - core index']
  #allocation1 [shape = 'u32[144,128]{1,0:T(1,128)}', space=vmem, size = 0x12000, scoped, tag = 'internal scratch']
  %s0 = inlined_call_operand.vmem [shape: bf16[128,128], index: 0, kind: input, shape index: {}]
  %s1 = inlined_call_operand.vmem [shape: bf16[128,128], index: 1, kind: input, shape index: {}]
  %s2 = inlined_call_operand.vmem [shape: f32[1,128], index: 2, kind: input, shape index: {}]
  %s3 = inlined_call_operand.vmem [shape: f32[128,128], index: 3, kind: output, shape index: {}]
  %s4 = sld [smem:[#allocation0]]
  $region45: #{meta_classifier_forward.5} parent=0
    _
  %s6 = ssub.s32 1, %s4
  %s7 = scalar_select 0, %s6, %s4
  loop: start=0, step=1, limit=6
  $region2: #{meta_classifier_forward.5} parent=0 // loop_pre_header
    _
  $region3: #{meta_classifier_forward.5} parent=0 // loop_header
    %s9 = sphi 0, %s13
    %p10 = scmp.ge.s32.totalorder %s9, 6
    %s19 = sphi 0, %s21
    %s22 = sphi 0, %s19
    %s23 = sphi 0, %s22
    %s39 = sphi 0, %s23
    %s43 = sphi 0, %s43
    %s45 = sphi 0, %s43
    %s46 = sphi 0, %s45
    %s60 = sphi 0, %s46
    %s64 = sphi 0, %s64
    %s66 = sphi 0, %s64
    %s67 = sphi 0, %s66
    %s81 = sphi 0, %s67
    %s87 = sphi 0, %s89
    %s90 = sphi 0, %s87
    %s91 = sphi 0, %s90
    %s107 = sphi 0, %s91
  $region4: #{meta_classifier_forward.5} parent=0 // loop_header_branch
    %12 = sbr.rel (%p10) target = $region8
  $region5: #{meta_classifier_forward.5} parent=0 // loop_body
    %s14 = ssub.s32 %s9, 1
    %s15 = ssub.s32 %s9, 2
    %s16 = sadd.s32 %s9, 1
    %s17 = ssub.s32 %s9, %s16
    %p18 = scmp.eq.s32.totalorder %s17, 0
    %s20 = sadd.s32 %s19, 1
    %s21 = scalar_select %p18, %s19, %s20
    %p24 = pneg %p18
    %p25 = scmp.eq.s32.totalorder %s9, 3
    %p26 = por %p24, %p25
    %p27 = scmp.ne.s32.totalorder %s19, %s22
    %p28 = scmp.eq.s32.totalorder %s9, 0
    %p29 = por %p27, %p28
    %p30 = scmp.ne.s32.totalorder %s19, %s22
    %p31 = scmp.eq.s32.totalorder %s14, 3
    %p32 = por %p30, %p31
    %p33 = scmp.ne.s32.totalorder %s22, %s23
    %p34 = scmp.eq.s32.totalorder %s14, 0
    %p35 = por %p33, %p34
    %p36 = scmp.ne.s32.totalorder %s22, %s23
    %p37 = scmp.eq.s32.totalorder %s15, 3
    %p38 = por %p36, %p37
    %p40 = scmp.ne.s32.totalorder %s23, %s39
    %p41 = scmp.eq.s32.totalorder %s15, 0
    %p42 = por %p40, %p41
    %s44 = sadd.s32 %s43, 1
    %p47 = scmp.eq.s32.totalorder %s9, 3
    %p48 = scmp.ne.s32.totalorder %s43, %s45
    %p49 = scmp.eq.s32.totalorder %s9, 0
    %p50 = por %p48, %p49
    %p51 = scmp.ne.s32.totalorder %s43, %s45
    %p52 = scmp.eq.s32.totalorder %s14, 3
    %p53 = por %p51, %p52
    %p54 = scmp.ne.s32.totalorder %s45, %s46
    %p55 = scmp.eq.s32.totalorder %s14, 0
    %p56 = por %p54, %p55
    %p57 = scmp.ne.s32.totalorder %s45, %s46
    %p58 = scmp.eq.s32.totalorder %s15, 3
    %p59 = por %p57, %p58
    %p61 = scmp.ne.s32.totalorder %s46, %s60
    %p62 = scmp.eq.s32.totalorder %s15, 0
    %p63 = por %p61, %p62
    %s65 = sadd.s32 %s64, 1
    %p68 = scmp.eq.s32.totalorder %s9, 3
    %p69 = scmp.ne.s32.totalorder %s64, %s66
    %p70 = scmp.eq.s32.totalorder %s9, 0
    %p71 = por %p69, %p70
    %p72 = scmp.ne.s32.totalorder %s64, %s66
    %p73 = scmp.eq.s32.totalorder %s14, 3
    %p74 = por %p72, %p73
    %p75 = scmp.ne.s32.totalorder %s66, %s67
    %p76 = scmp.eq.s32.totalorder %s14, 0
    %p77 = por %p75, %p76
    %p78 = scmp.ne.s32.totalorder %s66, %s67
    %p79 = scmp.eq.s32.totalorder %s15, 3
    %p80 = por %p78, %p79
    %p82 = scmp.ne.s32.totalorder %s67, %s81
    %p83 = scmp.eq.s32.totalorder %s15, 0
    %p84 = por %p82, %p83
    %s85 = ssub.s32 %s9, %s16
    %p86 = scmp.eq.s32.totalorder %s85, 0
    %s88 = sadd.s32 %s87, 1
    %s89 = scalar_select %p86, %s87, %s88
    %p92 = pneg %p86
    %p93 = scmp.eq.s32.totalorder %s9, 3
    %p94 = por %p92, %p93
    %p95 = scmp.ne.s32.totalorder %s87, %s90
    %p96 = scmp.eq.s32.totalorder %s9, 0
    %p97 = por %p95, %p96
    %p98 = scmp.ne.s32.totalorder %s87, %s90
    %p99 = scmp.eq.s32.totalorder %s14, 3
    %p100 = por %p98, %p99
    %p101 = scmp.ne.s32.totalorder %s90, %s91
    %p102 = scmp.eq.s32.totalorder %s14, 0
    %p103 = por %p101, %p102
    %p104 = scmp.ne.s32.totalorder %s90, %s91
    %p105 = scmp.eq.s32.totalorder %s15, 3
    %p106 = por %p104, %p105
    %p108 = scmp.ne.s32.totalorder %s91, %s107
    %p109 = scmp.eq.s32.totalorder %s15, 0
    %p110 = por %p108, %p109
    %p111 = scmp.le.s32.totalorder 1, %s9
    %p112 = scmp.lt.s32.totalorder %s9, 5
    %p113 = pnand %p111, %p112
    %p114 = pneg %p113
    // Predicated region
    $region9: #{meta_classifier_forward.5} parent=5 // pred_check
      _
    $region10: #{meta_classifier_forward.5} parent=5 // pred_check_branch
      %116 = sbr.rel (%p113) target = $region12
    $region11: #{meta_classifier_forward.5} parent=5 // pred_region
      %s117 = ssub.s32 %s9, 1
      // Predicated region
      $region13: #{meta_classifier_forward.5} parent=11 // pred_check
        %p118 = pneg %p56
      $region14: #{meta_classifier_forward.5} parent=11 // pred_check_branch
        %120 = sbr.rel (%p118) target = $region16
      $region15: #{meta_classifier_forward.5} parent=11 // pred_region
        _
      $region16: #{meta_classifier_forward.5} parent=11 // pred_fallthru
        _
      // Predicated region
      $region17: #{meta_classifier_forward.5} parent=11 // pred_check
        %p121 = pneg %p77
      $region18: #{meta_classifier_forward.5} parent=11 // pred_check_branch
        %123 = sbr.rel (%p121) target = $region20
      $region19: #{meta_classifier_forward.5} parent=11 // pred_region
        _
      $region20: #{meta_classifier_forward.5} parent=11 // pred_fallthru
        _
    $region12: #{meta_classifier_forward.5} parent=5 // pred_fallthru
      _
    %p124 = scmp.lt.s32.totalorder %s9, 4
    // Predicated region
    $region21: #{meta_classifier_forward.5} parent=5 // pred_check
      %p125 = pneg %p124
    $region22: #{meta_classifier_forward.5} parent=5 // pred_check_branch
      %127 = sbr.rel (%p125) target = $region24
    $region23: #{meta_classifier_forward.5} parent=5 // pred_region
      // Predicated region
      $region25: #{meta_classifier_forward.5} parent=23 // pred_check
        %p128 = pneg %p29
      $region26: #{meta_classifier_forward.5} parent=23 // pred_check_branch
        %130 = sbr.rel (%p128) target = $region28
      $region27: #{meta_classifier_forward.5} parent=23 // pred_region
        %s131 = smul.u32 4, %s9
        %p132 = scmp.lt.s32.totalorder %s131, 15
        %s133 = scalar_select %p132, %s131, 15
        %s134 = smul.addr %s133, 4
        %s135 = scalar_lea.vmem %s0, %s134
        %s136 = smul.u32 4, %s9
      $region28: #{meta_classifier_forward.5} parent=23 // pred_fallthru
        _
    $region24: #{meta_classifier_forward.5} parent=5 // pred_fallthru
      _
    %p137 = scmp.le.s32.totalorder 1, %s9
    %p138 = scmp.lt.s32.totalorder %s9, 5
    %p139 = pnand %p137, %p138
    %p140 = pneg %p139
    // Predicated region
    $region29: #{meta_classifier_forward.5} parent=5 // pred_check
      _
    $region30: #{meta_classifier_forward.5} parent=5 // pred_check_branch
      %142 = sbr.rel (%p139) target = $region32
    $region31: #{meta_classifier_forward.5} parent=5 // pred_region
      %s143 = ssub.s32 %s9, 1
      %s144 = smul.u32 4, %s14
      %p145 = scmp.lt.s32.totalorder %s144, 15
      %s146 = scalar_select %p145, %s144, 15
      %s147 = smul.addr %s146, 4
      %s148 = scalar_lea.vmem %s0, %s147
      %p149 = pneg %p35
      %p150 = pneg %p32
      %p151 = pneg %p56
      %p152 = pneg %p53
      %p153 = pneg %p77
      %p154 = pneg %p74
      %p155 = pneg %p103
      %p156 = pneg %p100
      %s157 = smul.u32 4, %s14
      %p158 = scmp.lt.s32.totalorder %s157, 15
      %s159 = scalar_select %p158, %s157, 15
      %s160 = smul.addr %s159, 8
      %s161 = scalar_lea.vmem %s3, %s160
      %s162 = smul.u32 4, %s14
      %p163 = scmp.lt.s32.totalorder %s162, 15
      %s164 = scalar_select %p163, %s162, 15
      %s165 = smul.addr %s164, 4
      %s166 = scalar_lea.vmem %s0, %s165
      %s167 = smul.u32 4, %s14
      %s168 = smul.u32 4, %s14
      %p169 = scmp.lt.s32.totalorder %s168, 15
      %s170 = scalar_select %p169, %s168, 15
      %s171 = smul.addr %s170, 8
      %s172 = scalar_lea.vmem %s3, %s171
      %s173 = smul.u32 4, %s14
      %v175 = vld [vmem:[%s166] sm:$0xf]
      %v176 = vld [vmem:[%s166 + $0x4] sm:$0xf]
      %v177 = vld [vmem:[%s166 + $0x8] sm:$0xf]
      %v178 = vld [vmem:[%s166 + $0xc] sm:$0xf]
      %v179 = vld [vmem:[%s1] sm:$0xf]
      %v180 = vld [vmem:[%s1 + $0x4] sm:$0xf]
      %v181 = vld [vmem:[%s1 + $0x8] sm:$0xf]
      %v182 = vld [vmem:[%s1 + $0xc] sm:$0xf]
      %v183 = vld [vmem:[%s1 + $0x10] sm:$0xf]
      %v184 = vld [vmem:[%s1 + $0x14] sm:$0xf]
      %v185 = vld [vmem:[%s1 + $0x18] sm:$0xf]
      %v186 = vld [vmem:[%s1 + $0x1c] sm:$0xf]
      %v187 = vld [vmem:[%s1 + $0x20] sm:$0xf]
      %v188 = vld [vmem:[%s1 + $0x24] sm:$0xf]
      %v189 = vld [vmem:[%s1 + $0x28] sm:$0xf]
      %v190 = vld [vmem:[%s1 + $0x2c] sm:$0xf]
      %v191 = vld [vmem:[%s1 + $0x30] sm:$0xf]
      %v192 = vld [vmem:[%s1 + $0x34] sm:$0xf]
      %v193 = vld [vmem:[%s1 + $0x38] sm:$0xf]
      %v194 = vld [vmem:[%s1 + $0x3c] sm:$0xf]
      %v195 = vld [vmem:[%s2] sm:$0x1]
      %v197 = vlaneseq
      %v198 = vshrl.u32 %v197, 7
      %v199 = vsub.s32 0, %v198
      %v200 = vrot.slane %v195, %v199
      %v206 = vunpack.c.l.b16 %v175
      %v207 = vunpack.c.l.b16 %v176
      %v208 = vunpack.c.l.b16 %v177
      %v209 = vunpack.c.l.b16 %v178
      %v210 = vpack.c.b16 %v207, %v206
      %v211 = vpack.c.b16 %v209, %v208
      %v230 = vunpack.c.l.b16 %v179
      %v231 = vunpack.c.l.b16 %v180
      %v232 = vunpack.c.l.b16 %v181
      %v233 = vunpack.c.l.b16 %v182
      %v234 = vunpack.c.l.b16 %v183
      %v235 = vunpack.c.l.b16 %v184
      %v236 = vunpack.c.l.b16 %v185
      %v237 = vunpack.c.l.b16 %v186
      %v238 = vunpack.c.l.b16 %v187
      %v239 = vunpack.c.l.b16 %v188
      %v240 = vunpack.c.l.b16 %v189
      %v241 = vunpack.c.l.b16 %v190
      %v242 = vunpack.c.l.b16 %v191
      %v243 = vunpack.c.l.b16 %v192
      %v244 = vunpack.c.l.b16 %v193
      %v245 = vunpack.c.l.b16 %v194
      %v246 = vpack.c.b16 %v231, %v230
      %v247 = vpack.c.b16 %v233, %v232
      %v248 = vpack.c.b16 %v235, %v234
      %v249 = vpack.c.b16 %v237, %v236
      %v250 = vpack.c.b16 %v239, %v238
      %v251 = vpack.c.b16 %v241, %v240
      %v252 = vpack.c.b16 %v243, %v242
      %v253 = vpack.c.b16 %v245, %v244
      %262 = vmatprep.subr.bf16.mxu0 0
      %263 = vmatpush1.bf16.msra.mxu0 %v246
      %264 = vmatprep.subr.bf16.mxu0 0
      %265 = vmatpush1.bf16.msra.mxu0 %v247
      %266 = vmatprep.subr.bf16.mxu0 0
      %267 = vmatpush1.bf16.msra.mxu0 %v248
      %268 = vmatprep.subr.bf16.mxu0 0
      %269 = vmatpush1.bf16.msra.mxu0 %v249
      %270 = vmatprep.subr.bf16.mxu0 0
      %271 = vmatpush1.bf16.msra.mxu0 %v250
      %272 = vmatprep.subr.bf16.mxu0 0
      %273 = vmatpush1.bf16.msra.mxu0 %v251
      %274 = vmatprep.subr.bf16.mxu0 0
      %275 = vmatpush1.bf16.msra.mxu0 %v252
      %276 = vmatprep.subr.bf16.mxu0 0
      %277 = vmatpush1.bf16.msra.mxu0 %v253
      %278 = vmatprep.subr.bf16.mxu0 0
      %279 = vmatpush1.bf16.msra.mxu0 0
      %280 = vmatprep.subr.bf16.mxu0 0
      %281 = vmatpush1.bf16.msra.mxu0 0
      %282 = vmatprep.subr.bf16.mxu0 0
      %283 = vmatpush1.bf16.msra.mxu0 0
      %284 = vmatprep.subr.bf16.mxu0 0
      %285 = vmatpush1.bf16.msra.mxu0 0
      %286 = vmatprep.subr.bf16.mxu0 0
      %287 = vmatpush1.bf16.msra.mxu0 0
      %288 = vmatprep.subr.bf16.mxu0 0
      %289 = vmatpush1.bf16.msra.mxu0 0
      %290 = vmatprep.subr.bf16.mxu0 0
      %291 = vmatpush1.bf16.msra.mxu0 0
      %292 = vmatprep.subr.bf16.mxu0 0
      %293 = vmatpush1.bf16.msra.mxu0 0
      %294 = vmatprep.mubr.bf16.mxu0 0
      %295 = vmatmul.mubr.bf16.gmra.mrb[0].mxu0 %v210
      %v296 = vpop.f32.mrb[0].mxu0
      %v297 = vadd.f32 %v200, %v296
      %v298 = vpop.f32.mrb[0].mxu0
      %v299 = vpop.f32.mrb[0].mxu0
      %v300 = vadd.f32 %v200, %v299
      %v301 = vpop.f32.mrb[0].mxu0
      %302 = vmatprep.mubr.bf16.mxu0 0
      %303 = vmatmul.mubr.bf16.gmra.mrb[0].mxu0 %v211
      %v304 = vpop.f32.mrb[0].mxu0
      %v305 = vadd.f32 %v200, %v304
      %v306 = vpop.f32.mrb[0].mxu0
      %v307 = vpop.f32.mrb[0].mxu0
      %v308 = vadd.f32 %v200, %v307
      %v309 = vpop.f32.mrb[0].mxu0
      %310 = vdwg.mxu0
      %311 = vst [vmem:[%s172] sm:$0xff] %v297
      %312 = vst [vmem:[%s172 + $0x8] sm:$0xff] %v300
      %313 = vst [vmem:[%s172 + $0x10] sm:$0xff] %v305
      %314 = vst [vmem:[%s172 + $0x18] sm:$0xff] %v308
      %s315 = smul.u32 4, %s14
      %p316 = scmp.lt.s32.totalorder %s315, 15
      %s317 = scalar_select %p316, %s315, 15
      %s318 = smul.addr %s317, 8
      %s319 = scalar_lea.vmem %s3, %s318
      // Predicated region
      $region33: #{meta_classifier_forward.5} parent=31 // pred_check
        %p320 = pneg %p100
      $region34: #{meta_classifier_forward.5} parent=31 // pred_check_branch
        %322 = sbr.rel (%p320) target = $region36
      $region35: #{meta_classifier_forward.5} parent=31 // pred_region
        %s323 = smul.u32 4, %s14
      $region36: #{meta_classifier_forward.5} parent=31 // pred_fallthru
        _
    $region32: #{meta_classifier_forward.5} parent=5 // pred_fallthru
      _
    %p324 = scmp.le.s32.totalorder 2, %s9
    // Predicated region
    $region37: #{meta_classifier_forward.5} parent=5 // pred_check
      %p325 = pneg %p324
    $region38: #{meta_classifier_forward.5} parent=5 // pred_check_branch
      %327 = sbr.rel (%p325) target = $region40
    $region39: #{meta_classifier_forward.5} parent=5 // pred_region
      %s328 = ssub.s32 %s9, 2
      // Predicated region
      $region41: #{meta_classifier_forward.5} parent=39 // pred_check
        %p329 = pneg %p106
      $region42: #{meta_classifier_forward.5} parent=39 // pred_check_branch
        %331 = sbr.rel (%p329) target = $region44
      $region43: #{meta_classifier_forward.5} parent=39 // pred_region
        %s332 = smul.u32 4, %s15
        %p333 = scmp.lt.s32.totalorder %s332, 15
        %s334 = scalar_select %p333, %s332, 15
        %s335 = smul.addr %s334, 8
        %s336 = scalar_lea.vmem %s3, %s335
      $region44: #{meta_classifier_forward.5} parent=39 // pred_fallthru
        _
    $region40: #{meta_classifier_forward.5} parent=5 // pred_fallthru
      _
  $region6: #{meta_classifier_forward.5} parent=0 // loop_footer
    %s13 = sadd.s32 1, %s9
  $region7: #{meta_classifier_forward.5} parent=0 // loop_footer_branch
    %8 = sbr.rel target = $region3
  $region8: #{meta_classifier_forward.5} parent=0 // loop_exit
    _

// kernel: meta_classifier_forward.4
$region0: #{meta_classifier_forward.4}
  #allocation0 [shape = 'u32[]', space=smem, size = 0x4, offset = 0x4, fixed_abs, tag = 'smem constant byte address 0x4 - core index']
  #allocation1 [shape = 'u32[144,128]{1,0:T(1,128)}', space=vmem, size = 0x12000, scoped, tag = 'internal scratch']
  %s0 = inlined_call_operand.vmem [shape: bf16[128,128], index: 0, kind: input, shape index: {}]
  %s1 = inlined_call_operand.vmem [shape: bf16[128,128], index: 1, kind: input, shape index: {}]
  %s2 = inlined_call_operand.vmem [shape: f32[1,128], index: 2, kind: input, shape index: {}]
  %s3 = inlined_call_operand.vmem [shape: bf16[128,128], index: 3, kind: output, shape index: {0}]
  %s4 = inlined_call_operand.vmem [shape: f32[4,1,128], index: 4, kind: output, shape index: {1}]
  %s5 = inlined_call_operand.vmem [shape: f32[4,1,128], index: 5, kind: output, shape index: {2}]
  %6 = xla_tuple %s3, %s4, %s5
  %s7 = sld [smem:[#allocation0]]
  $region61: #{meta_classifier_forward.4} parent=0
    _
  %s9 = ssub.s32 1, %s7
  %s10 = scalar_select 0, %s9, %s7
  loop: start=0, step=1, limit=6
  $region2: #{meta_classifier_forward.4} parent=0 // loop_pre_header
    _
  $region3: #{meta_classifier_forward.4} parent=0 // loop_header
    %s12 = sphi 0, %s16
    %p13 = scmp.ge.s32.totalorder %s12, 6
    %s22 = sphi 0, %s24
    %s25 = sphi 0, %s22
    %s26 = sphi 0, %s25
    %s42 = sphi 0, %s26
    %s46 = sphi 0, %s46
    %s48 = sphi 0, %s46
    %s49 = sphi 0, %s48
    %s63 = sphi 0, %s49
    %s67 = sphi 0, %s67
    %s69 = sphi 0, %s67
    %s70 = sphi 0, %s69
    %s84 = sphi 0, %s70
    %s90 = sphi 0, %s92
    %s93 = sphi 0, %s90
    %s94 = sphi 0, %s93
    %s110 = sphi 0, %s94
    %s116 = sphi 0, %s118
    %s119 = sphi 0, %s116
    %s120 = sphi 0, %s119
    %s136 = sphi 0, %s120
    %s142 = sphi 0, %s144
    %s145 = sphi 0, %s142
    %s146 = sphi 0, %s145
    %s162 = sphi 0, %s146
  $region4: #{meta_classifier_forward.4} parent=0 // loop_header_branch
    %15 = sbr.rel (%p13) target = $region8
  $region5: #{meta_classifier_forward.4} parent=0 // loop_body
    %s17 = ssub.s32 %s12, 1
    %s18 = ssub.s32 %s12, 2
    %s19 = sadd.s32 %s12, 1
    %s20 = ssub.s32 %s12, %s19
    %p21 = scmp.eq.s32.totalorder %s20, 0
    %s23 = sadd.s32 %s22, 1
    %s24 = scalar_select %p21, %s22, %s23
    %p27 = pneg %p21
    %p28 = scmp.eq.s32.totalorder %s12, 3
    %p29 = por %p27, %p28
    %p30 = scmp.ne.s32.totalorder %s22, %s25
    %p31 = scmp.eq.s32.totalorder %s12, 0
    %p32 = por %p30, %p31
    %p33 = scmp.ne.s32.totalorder %s22, %s25
    %p34 = scmp.eq.s32.totalorder %s17, 3
    %p35 = por %p33, %p34
    %p36 = scmp.ne.s32.totalorder %s25, %s26
    %p37 = scmp.eq.s32.totalorder %s17, 0
    %p38 = por %p36, %p37
    %p39 = scmp.ne.s32.totalorder %s25, %s26
    %p40 = scmp.eq.s32.totalorder %s18, 3
    %p41 = por %p39, %p40
    %p43 = scmp.ne.s32.totalorder %s26, %s42
    %p44 = scmp.eq.s32.totalorder %s18, 0
    %p45 = por %p43, %p44
    %s47 = sadd.s32 %s46, 1
    %p50 = scmp.eq.s32.totalorder %s12, 3
    %p51 = scmp.ne.s32.totalorder %s46, %s48
    %p52 = scmp.eq.s32.totalorder %s12, 0
    %p53 = por %p51, %p52
    %p54 = scmp.ne.s32.totalorder %s46, %s48
    %p55 = scmp.eq.s32.totalorder %s17, 3
    %p56 = por %p54, %p55
    %p57 = scmp.ne.s32.totalorder %s48, %s49
    %p58 = scmp.eq.s32.totalorder %s17, 0
    %p59 = por %p57, %p58
    %p60 = scmp.ne.s32.totalorder %s48, %s49
    %p61 = scmp.eq.s32.totalorder %s18, 3
    %p62 = por %p60, %p61
    %p64 = scmp.ne.s32.totalorder %s49, %s63
    %p65 = scmp.eq.s32.totalorder %s18, 0
    %p66 = por %p64, %p65
    %s68 = sadd.s32 %s67, 1
    %p71 = scmp.eq.s32.totalorder %s12, 3
    %p72 = scmp.ne.s32.totalorder %s67, %s69
    %p73 = scmp.eq.s32.totalorder %s12, 0
    %p74 = por %p72, %p73
    %p75 = scmp.ne.s32.totalorder %s67, %s69
    %p76 = scmp.eq.s32.totalorder %s17, 3
    %p77 = por %p75, %p76
    %p78 = scmp.ne.s32.totalorder %s69, %s70
    %p79 = scmp.eq.s32.totalorder %s17, 0
    %p80 = por %p78, %p79
    %p81 = scmp.ne.s32.totalorder %s69, %s70
    %p82 = scmp.eq.s32.totalorder %s18, 3
    %p83 = por %p81, %p82
    %p85 = scmp.ne.s32.totalorder %s70, %s84
    %p86 = scmp.eq.s32.totalorder %s18, 0
    %p87 = por %p85, %p86
    %s88 = ssub.s32 %s12, %s19
    %p89 = scmp.eq.s32.totalorder %s88, 0
    %s91 = sadd.s32 %s90, 1
    %s92 = scalar_select %p89, %s90, %s91
    %p95 = pneg %p89
    %p96 = scmp.eq.s32.totalorder %s12, 3
    %p97 = por %p95, %p96
    %p98 = scmp.ne.s32.totalorder %s90, %s93
    %p99 = scmp.eq.s32.totalorder %s12, 0
    %p100 = por %p98, %p99
    %p101 = scmp.ne.s32.totalorder %s90, %s93
    %p102 = scmp.eq.s32.totalorder %s17, 3
    %p103 = por %p101, %p102
    %p104 = scmp.ne.s32.totalorder %s93, %s94
    %p105 = scmp.eq.s32.totalorder %s17, 0
    %p106 = por %p104, %p105
    %p107 = scmp.ne.s32.totalorder %s93, %s94
    %p108 = scmp.eq.s32.totalorder %s18, 3
    %p109 = por %p107, %p108
    %p111 = scmp.ne.s32.totalorder %s94, %s110
    %p112 = scmp.eq.s32.totalorder %s18, 0
    %p113 = por %p111, %p112
    %s114 = ssub.s32 %s12, %s19
    %p115 = scmp.eq.s32.totalorder %s114, 0
    %s117 = sadd.s32 %s116, 1
    %s118 = scalar_select %p115, %s116, %s117
    %p121 = pneg %p115
    %p122 = scmp.eq.s32.totalorder %s12, 3
    %p123 = por %p121, %p122
    %p124 = scmp.ne.s32.totalorder %s116, %s119
    %p125 = scmp.eq.s32.totalorder %s12, 0
    %p126 = por %p124, %p125
    %p127 = scmp.ne.s32.totalorder %s116, %s119
    %p128 = scmp.eq.s32.totalorder %s17, 3
    %p129 = por %p127, %p128
    %p130 = scmp.ne.s32.totalorder %s119, %s120
    %p131 = scmp.eq.s32.totalorder %s17, 0
    %p132 = por %p130, %p131
    %p133 = scmp.ne.s32.totalorder %s119, %s120
    %p134 = scmp.eq.s32.totalorder %s18, 3
    %p135 = por %p133, %p134
    %p137 = scmp.ne.s32.totalorder %s120, %s136
    %p138 = scmp.eq.s32.totalorder %s18, 0
    %p139 = por %p137, %p138
    %s140 = ssub.s32 %s12, %s19
    %p141 = scmp.eq.s32.totalorder %s140, 0
    %s143 = sadd.s32 %s142, 1
    %s144 = scalar_select %p141, %s142, %s143
    %p147 = pneg %p141
    %p148 = scmp.eq.s32.totalorder %s12, 3
    %p149 = por %p147, %p148
    %p150 = scmp.ne.s32.totalorder %s142, %s145
    %p151 = scmp.eq.s32.totalorder %s12, 0
    %p152 = por %p150, %p151
    %p153 = scmp.ne.s32.totalorder %s142, %s145
    %p154 = scmp.eq.s32.totalorder %s17, 3
    %p155 = por %p153, %p154
    %p156 = scmp.ne.s32.totalorder %s145, %s146
    %p157 = scmp.eq.s32.totalorder %s17, 0
    %p158 = por %p156, %p157
    %p159 = scmp.ne.s32.totalorder %s145, %s146
    %p160 = scmp.eq.s32.totalorder %s18, 3
    %p161 = por %p159, %p160
    %p163 = scmp.ne.s32.totalorder %s146, %s162
    %p164 = scmp.eq.s32.totalorder %s18, 0
    %p165 = por %p163, %p164
    %p166 = scmp.le.s32.totalorder 1, %s12
    %p167 = scmp.lt.s32.totalorder %s12, 5
    %p168 = pnand %p166, %p167
    %p169 = pneg %p168
    // Predicated region
    $region9: #{meta_classifier_forward.4} parent=5 // pred_check
      _
    $region10: #{meta_classifier_forward.4} parent=5 // pred_check_branch
      %171 = sbr.rel (%p168) target = $region12
    $region11: #{meta_classifier_forward.4} parent=5 // pred_region
      %s172 = ssub.s32 %s12, 1
      // Predicated region
      $region13: #{meta_classifier_forward.4} parent=11 // pred_check
        %p173 = pneg %p59
      $region14: #{meta_classifier_forward.4} parent=11 // pred_check_branch
        %175 = sbr.rel (%p173) target = $region16
      $region15: #{meta_classifier_forward.4} parent=11 // pred_region
        _
      $region16: #{meta_classifier_forward.4} parent=11 // pred_fallthru
        _
      // Predicated region
      $region17: #{meta_classifier_forward.4} parent=11 // pred_check
        %p176 = pneg %p80
      $region18: #{meta_classifier_forward.4} parent=11 // pred_check_branch
        %178 = sbr.rel (%p176) target = $region20
      $region19: #{meta_classifier_forward.4} parent=11 // pred_region
        _
      $region20: #{meta_classifier_forward.4} parent=11 // pred_fallthru
        _
    $region12: #{meta_classifier_forward.4} parent=5 // pred_fallthru
      _
    %p179 = scmp.lt.s32.totalorder %s12, 4
    // Predicated region
    $region21: #{meta_classifier_forward.4} parent=5 // pred_check
      %p180 = pneg %p179
    $region22: #{meta_classifier_forward.4} parent=5 // pred_check_branch
      %182 = sbr.rel (%p180) target = $region24
    $region23: #{meta_classifier_forward.4} parent=5 // pred_region
      // Predicated region
      $region25: #{meta_classifier_forward.4} parent=23 // pred_check
        %p183 = pneg %p32
      $region26: #{meta_classifier_forward.4} parent=23 // pred_check_branch
        %185 = sbr.rel (%p183) target = $region28
      $region27: #{meta_classifier_forward.4} parent=23 // pred_region
        %s186 = smul.u32 4, %s12
        %p187 = scmp.lt.s32.totalorder %s186, 15
        %s188 = scalar_select %p187, %s186, 15
        %s189 = smul.addr %s188, 4
        %s190 = scalar_lea.vmem %s0, %s189
        %s191 = smul.u32 4, %s12
      $region28: #{meta_classifier_forward.4} parent=23 // pred_fallthru
        _
    $region24: #{meta_classifier_forward.4} parent=5 // pred_fallthru
      _
    %p192 = scmp.le.s32.totalorder 1, %s12
    %p193 = scmp.lt.s32.totalorder %s12, 5
    %p194 = pnand %p192, %p193
    %p195 = pneg %p194
    // Predicated region
    $region29: #{meta_classifier_forward.4} parent=5 // pred_check
      _
    $region30: #{meta_classifier_forward.4} parent=5 // pred_check_branch
      %197 = sbr.rel (%p194) target = $region32
    $region31: #{meta_classifier_forward.4} parent=5 // pred_region
      %s198 = ssub.s32 %s12, 1
      %s199 = smul.u32 4, %s17
      %p200 = scmp.lt.s32.totalorder %s199, 15
      %s201 = scalar_select %p200, %s199, 15
      %s202 = smul.addr %s201, 4
      %s203 = scalar_lea.vmem %s0, %s202
      %p204 = pneg %p38
      %p205 = pneg %p35
      %p206 = pneg %p59
      %p207 = pneg %p56
      %p208 = pneg %p80
      %p209 = pneg %p77
      %p210 = pneg %p106
      %p211 = pneg %p103
      %s212 = smul.u32 4, %s17
      %p213 = scmp.lt.s32.totalorder %s212, 15
      %s214 = scalar_select %p213, %s212, 15
      %s215 = smul.addr %s214, 4
      %s216 = scalar_lea.vmem %s3, %s215
      %p217 = pneg %p132
      %p218 = pneg %p129
      %p219 = scmp.lt.s32.totalorder %s17, 3
      %s220 = scalar_select %p219, %s17, 3
      %s221 = scalar_lea.vmem %s4, %s220
      %p222 = pneg %p158
      %p223 = pneg %p155
      %p224 = scmp.lt.s32.totalorder %s17, 3
      %s225 = scalar_select %p224, %s17, 3
      %s226 = scalar_lea.vmem %s5, %s225
      %s227 = smul.u32 4, %s17
      %p228 = scmp.lt.s32.totalorder %s227, 15
      %s229 = scalar_select %p228, %s227, 15
      %s230 = smul.addr %s229, 4
      %s231 = scalar_lea.vmem %s0, %s230
      %s232 = smul.u32 4, %s17
      %s233 = smul.u32 4, %s17
      %p234 = scmp.lt.s32.totalorder %s233, 15
      %s235 = scalar_select %p234, %s233, 15
      %s236 = smul.addr %s235, 4
      %s237 = scalar_lea.vmem %s3, %s236
      %s238 = smul.u32 4, %s17
      %p239 = scmp.lt.s32.totalorder %s17, 3
      %s240 = scalar_select %p239, %s17, 3
      %s241 = scalar_lea.vmem %s4, %s240
      %p242 = scmp.lt.s32.totalorder %s17, 3
      %s243 = scalar_select %p242, %s17, 3
      %s244 = scalar_lea.vmem %s5, %s243
      %v246 = vld [vmem:[%s231] sm:$0xf]
      %v247 = vld [vmem:[%s231 + $0x4] sm:$0xf]
      %v248 = vld [vmem:[%s231 + $0x8] sm:$0xf]
      %v249 = vld [vmem:[%s231 + $0xc] sm:$0xf]
      %v250 = vld [vmem:[%s1] sm:$0xf]
      %v251 = vld [vmem:[%s1 + $0x4] sm:$0xf]
      %v252 = vld [vmem:[%s1 + $0x8] sm:$0xf]
      %v253 = vld [vmem:[%s1 + $0xc] sm:$0xf]
      %v254 = vld [vmem:[%s1 + $0x10] sm:$0xf]
      %v255 = vld [vmem:[%s1 + $0x14] sm:$0xf]
      %v256 = vld [vmem:[%s1 + $0x18] sm:$0xf]
      %v257 = vld [vmem:[%s1 + $0x1c] sm:$0xf]
      %v258 = vld [vmem:[%s1 + $0x20] sm:$0xf]
      %v259 = vld [vmem:[%s1 + $0x24] sm:$0xf]
      %v260 = vld [vmem:[%s1 + $0x28] sm:$0xf]
      %v261 = vld [vmem:[%s1 + $0x2c] sm:$0xf]
      %v262 = vld [vmem:[%s1 + $0x30] sm:$0xf]
      %v263 = vld [vmem:[%s1 + $0x34] sm:$0xf]
      %v264 = vld [vmem:[%s1 + $0x38] sm:$0xf]
      %v265 = vld [vmem:[%s1 + $0x3c] sm:$0xf]
      %v266 = vld [vmem:[%s2] sm:$0x1]
      %v268 = vlaneseq
      %v269 = vshrl.u32 %v268, 7
      %v270 = vsub.s32 0, %v269
      %v271 = vrot.slane %v266, %v270
      %v277 = vunpack.c.l.b16 %v246
      %v278 = vunpack.c.l.b16 %v247
      %v279 = vunpack.c.l.b16 %v248
      %v280 = vunpack.c.l.b16 %v249
      %v281 = vpack.c.b16 %v278, %v277
      %v282 = vpack.c.b16 %v280, %v279
      %v301 = vunpack.c.l.b16 %v250
      %v302 = vunpack.c.l.b16 %v251
      %v303 = vunpack.c.l.b16 %v252
      %v304 = vunpack.c.l.b16 %v253
      %v305 = vunpack.c.l.b16 %v254
      %v306 = vunpack.c.l.b16 %v255
      %v307 = vunpack.c.l.b16 %v256
      %v308 = vunpack.c.l.b16 %v257
      %v309 = vunpack.c.l.b16 %v258
      %v310 = vunpack.c.l.b16 %v259
      %v311 = vunpack.c.l.b16 %v260
      %v312 = vunpack.c.l.b16 %v261
      %v313 = vunpack.c.l.b16 %v262
      %v314 = vunpack.c.l.b16 %v263
      %v315 = vunpack.c.l.b16 %v264
      %v316 = vunpack.c.l.b16 %v265
      %v317 = vpack.c.b16 %v302, %v301
      %v318 = vpack.c.b16 %v304, %v303
      %v319 = vpack.c.b16 %v306, %v305
      %v320 = vpack.c.b16 %v308, %v307
      %v321 = vpack.c.b16 %v310, %v309
      %v322 = vpack.c.b16 %v312, %v311
      %v323 = vpack.c.b16 %v314, %v313
      %v324 = vpack.c.b16 %v316, %v315
      %333 = vmatprep.subr.bf16.mxu0 0
      %334 = vmatpush1.bf16.msra.mxu0 %v317
      %335 = vmatprep.subr.bf16.mxu0 0
      %336 = vmatpush1.bf16.msra.mxu0 %v318
      %337 = vmatprep.subr.bf16.mxu0 0
      %338 = vmatpush1.bf16.msra.mxu0 %v319
      %339 = vmatprep.subr.bf16.mxu0 0
      %340 = vmatpush1.bf16.msra.mxu0 %v320
      %341 = vmatprep.subr.bf16.mxu0 0
      %342 = vmatpush1.bf16.msra.mxu0 %v321
      %343 = vmatprep.subr.bf16.mxu0 0
      %344 = vmatpush1.bf16.msra.mxu0 %v322
      %345 = vmatprep.subr.bf16.mxu0 0
      %346 = vmatpush1.bf16.msra.mxu0 %v323
      %347 = vmatprep.subr.bf16.mxu0 0
      %348 = vmatpush1.bf16.msra.mxu0 %v324
      %349 = vmatprep.subr.bf16.mxu0 0
      %350 = vmatpush1.bf16.msra.mxu0 0
      %351 = vmatprep.subr.bf16.mxu0 0
      %352 = vmatpush1.bf16.msra.mxu0 0
      %353 = vmatprep.subr.bf16.mxu0 0
      %354 = vmatpush1.bf16.msra.mxu0 0
      %355 = vmatprep.subr.bf16.mxu0 0
      %356 = vmatpush1.bf16.msra.mxu0 0
      %357 = vmatprep.subr.bf16.mxu0 0
      %358 = vmatpush1.bf16.msra.mxu0 0
      %359 = vmatprep.subr.bf16.mxu0 0
      %360 = vmatpush1.bf16.msra.mxu0 0
      %361 = vmatprep.subr.bf16.mxu0 0
      %362 = vmatpush1.bf16.msra.mxu0 0
      %363 = vmatprep.subr.bf16.mxu0 0
      %364 = vmatpush1.bf16.msra.mxu0 0
      %365 = vmatprep.mubr.bf16.mxu0 0
      %366 = vmatmul.mubr.bf16.gmra.mrb[0].mxu0 %v281
      %v367 = vpop.f32.mrb[0].mxu0
      %v368 = vadd.f32 %v271, %v367
      %v369 = vpop.f32.mrb[0].mxu0
      %v370 = vpop.f32.mrb[0].mxu0
      %v371 = vadd.f32 %v271, %v370
      %v372 = vpop.f32.mrb[0].mxu0
      %373 = vmatprep.mubr.bf16.mxu0 0
      %374 = vmatmul.mubr.bf16.gmra.mrb[0].mxu0 %v282
      %v375 = vpop.f32.mrb[0].mxu0
      %v376 = vadd.f32 %v271, %v375
      %v377 = vpop.f32.mrb[0].mxu0
      %v378 = vpop.f32.mrb[0].mxu0
      %v379 = vadd.f32 %v271, %v378
      %v380 = vpop.f32.mrb[0].mxu0
      %381 = vdwg.mxu0
      %v382 = vmax.f32 %v368, 0.0
      %v383 = vmax.f32 %v371, 0.0
      %v384 = vmax.f32 %v376, 0.0
      %v385 = vmax.f32 %v379, 0.0
      %v386 = vpack.c.bf16 %v383, %v382
      %v387 = vpack.c.bf16 %v385, %v384
      %v390 = vunpack.c.l.b16 %v386
      %v391 = vunpack.c.h.b16 %v386
      %v392 = vunpack.c.l.b16 %v387
      %v393 = vunpack.c.h.b16 %v387
      %v394 = vpack.c.b16 %v390, %v390
      %v395 = vpack.c.b16 %v391, %v391
      %v396 = vpack.c.b16 %v392, %v392
      %v397 = vpack.c.b16 %v393, %v393
      %402 = vst [vmem:[%s237] sm:$0xf] %v394
      %403 = vst [vmem:[%s237 + $0x4] sm:$0xf] %v395
      %404 = vst [vmem:[%s237 + $0x8] sm:$0xf] %v396
      %405 = vst [vmem:[%s237 + $0xc] sm:$0xf] %v397
      %v406 = vadd.f32 %v382, %v383
      %v407 = vadd.f32 %v406, %v384
      %v408 = vadd.f32 %v407, %v385
      %v409 = vrot.slane %v408, 4
      %v410 = vadd.f32 %v408, %v409
      %v411 = vrot.slane %v410, 2
      %v412 = vadd.f32 %v410, %v411
      %v413 = vrot.slane %v412, 1
      %v414 = vadd.f32 %v412, %v413
      %415 = vst [vmem:[%s241] sm:$0x1] %v414
      %v416 = vmul.f32 %v382, %v382
      %v417 = vmul.f32 %v383, %v383
      %v418 = vmul.f32 %v384, %v384
      %v419 = vmul.f32 %v385, %v385
      %v420 = vadd.f32 %v416, %v417
      %v421 = vadd.f32 %v420, %v418
      %v422 = vadd.f32 %v421, %v419
      %v423 = vrot.slane %v422, 4
      %v424 = vadd.f32 %v422, %v423
      %v425 = vrot.slane %v424, 2
      %v426 = vadd.f32 %v424, %v425
      %v427 = vrot.slane %v426, 1
      %v428 = vadd.f32 %v426, %v427
      %429 = vst [vmem:[%s244] sm:$0x1] %v428
      %s430 = smul.u32 4, %s17
      %p431 = scmp.lt.s32.totalorder %s430, 15
      %s432 = scalar_select %p431, %s430, 15
      %s433 = smul.addr %s432, 4
      %s434 = scalar_lea.vmem %s3, %s433
      %p435 = scmp.lt.s32.totalorder %s17, 3
      %s436 = scalar_select %p435, %s17, 3
      %s437 = scalar_lea.vmem %s4, %s436
      %p438 = scmp.lt.s32.totalorder %s17, 3
      %s439 = scalar_select %p438, %s17, 3
      %s440 = scalar_lea.vmem %s5, %s439
      // Predicated region
      $region33: #{meta_classifier_forward.4} parent=31 // pred_check
        %p441 = pneg %p103
      $region34: #{meta_classifier_forward.4} parent=31 // pred_check_branch
        %443 = sbr.rel (%p441) target = $region36
      $region35: #{meta_classifier_forward.4} parent=31 // pred_region
        %s444 = smul.u32 4, %s17
      $region36: #{meta_classifier_forward.4} parent=31 // pred_fallthru
        _
      // Predicated region
      $region37: #{meta_classifier_forward.4} parent=31 // pred_check
        %p445 = pneg %p129
      $region38: #{meta_classifier_forward.4} parent=31 // pred_check_branch
        %447 = sbr.rel (%p445) target = $region40
      $region39: #{meta_classifier_forward.4} parent=31 // pred_region
        _
      $region40: #{meta_classifier_forward.4} parent=31 // pred_fallthru
        _
      // Predicated region
      $region41: #{meta_classifier_forward.4} parent=31 // pred_check
        %p448 = pneg %p155
      $region42: #{meta_classifier_forward.4} parent=31 // pred_check_branch
        %450 = sbr.rel (%p448) target = $region44
      $region43: #{meta_classifier_forward.4} parent=31 // pred_region
        _
      $region44: #{meta_classifier_forward.4} parent=31 // pred_fallthru
        _
    $region32: #{meta_classifier_forward.4} parent=5 // pred_fallthru
      _
    %p451 = scmp.le.s32.totalorder 2, %s12
    // Predicated region
    $region45: #{meta_classifier_forward.4} parent=5 // pred_check
      %p452 = pneg %p451
    $region46: #{meta_classifier_forward.4} parent=5 // pred_check_branch
      %454 = sbr.rel (%p452) target = $region48
    $region47: #{meta_classifier_forward.4} parent=5 // pred_region
      %s455 = ssub.s32 %s12, 2
      // Predicated region
      $region49: #{meta_classifier_forward.4} parent=47 // pred_check
        %p456 = pneg %p109
      $region50: #{meta_classifier_forward.4} parent=47 // pred_check_branch
        %458 = sbr.rel (%p456) target = $region52
      $region51: #{meta_classifier_forward.4} parent=47 // pred_region
        %s459 = smul.u32 4, %s18
        %p460 = scmp.lt.s32.totalorder %s459, 15
        %s461 = scalar_select %p460, %s459, 15
        %s462 = smul.addr %s461, 4
        %s463 = scalar_lea.vmem %s3, %s462
      $region52: #{meta_classifier_forward.4} parent=47 // pred_fallthru
        _
      // Predicated region
      $region53: #{meta_classifier_forward.4} parent=47 // pred_check
        %p464 = pneg %p135
      $region54: #{meta_classifier_forward.4} parent=47 // pred_check_branch
        %466 = sbr.rel (%p464) target = $region56
      $region55: #{meta_classifier_forward.4} parent=47 // pred_region
        %p467 = scmp.lt.s32.totalorder %s18, 3
        %s468 = scalar_select %p467, %s18, 3
        %s469 = scalar_lea.vmem %s4, %s468
      $region56: #{meta_classifier_forward.4} parent=47 // pred_fallthru
        _
      // Predicated region
      $region57: #{meta_classifier_forward.4} parent=47 // pred_check
        %p470 = pneg %p161
      $region58: #{meta_classifier_forward.4} parent=47 // pred_check_branch
        %472 = sbr.rel (%p470) target = $region60
      $region59: #{meta_classifier_forward.4} parent=47 // pred_region
        %p473 = scmp.lt.s32.totalorder %s18, 3
        %s474 = scalar_select %p473, %s18, 3
        %s475 = scalar_lea.vmem %s5, %s474
      $region60: #{meta_classifier_forward.4} parent=47 // pred_fallthru
        _
    $region48: #{meta_classifier_forward.4} parent=5 // pred_fallthru
      _
  $region6: #{meta_classifier_forward.4} parent=0 // loop_footer
    %s16 = sadd.s32 1, %s12
  $region7: #{meta_classifier_forward.4} parent=0 // loop_footer_branch
    %11 = sbr.rel target = $region3
  $region8: #{meta_classifier_forward.4} parent=0 // loop_exit
    _

</llo_original>
